<compile_context>
chip_gen: v6e
topology: v6e:2x2x1
jax: 0.10.0
libtpu: 0.0.40
codegen_flags: <defaults>
</compile_context>

<pallas_src>
import functools

import jax
import jax.numpy as jnp
from jax.experimental import pallas as pl
from jax.experimental.pallas import tpu as pltpu


def _vmem_capacity_bytes():
    """Physical VMEM of the local TPU generation (fallback: 64 MiB)."""
    try:
        info = pltpu.get_tpu_info()
        cap = int(getattr(info, "vmem_capacity_bytes", 64 * 1024 * 1024))
        if cap <= 0:
            cap = 64 * 1024 * 1024
        return cap
    except Exception:
        return 64 * 1024 * 1024


def _vmem_limit_bytes(vmem_cap):
    """Scoped-VMEM limit: ~3/4 of physical (96 MiB on v5e/v6e, 48 MiB on v7x)."""
    return int(min(vmem_cap * 3 // 4, 112 * 1024 * 1024))


def _choose_q_tile(n, vmem_cap):
    """Largest MXU-shaped query tile that divides N (512 allowed on big-VMEM chips)."""
    candidates = (512, 256, 128) if vmem_cap >= 96 * 1024 * 1024 else (256, 128)
    for tq in candidates:
        if n >= tq and n % tq == 0:
            return tq
    return n  # full-extent block (legal even if not 8/128-aligned, just slower)


def _attention_kernel(x_ref, wqkv_ref, bqkv_ref, wproj_ref, bproj_ref,
                      o_ref, qkv_ref, *, num_heads, head_dim, q_tile,
                      compute_dtype):
    # x_ref:     (1, N, C)   full sequence of one batch element (compute dtype)
    # wqkv_ref:  (C, 3C)     fused [Wq | Wk | Wv], softmax scale folded into Wq
    # bqkv_ref:  (1, 3C)     fused qkv bias (f32; zeros when qkv_bias=False)
    # wproj_ref: (C, C)      output projection weight
    # bproj_ref: (1, C)      output projection bias (f32)
    # o_ref:     (1, tq, C)  output tile
    # qkv_ref:   (N, 3C)     VMEM cache of x @ W_qkv + b_qkv (compute dtype),
    #                        persistent across query tiles of the same batch.
    qi = pl.program_id(1)
    n_seq = x_ref.shape[1]
    c_dim = x_ref.shape[2]
    h_cnt = num_heads
    d_hd = head_dim

    # --- fill the per-batch QKV cache once (qi == 0), reuse for qi > 0 ------
    @pl.when(qi == 0)
    def _fill_qkv_cache():
        x_all = x_ref[0]                                              # (N, C)
        qkv = jnp.dot(x_all, wqkv_ref[...],
                      preferred_element_type=jnp.float32)             # (N, 3C)
        qkv = qkv + bqkv_ref[...]                                      # bias (f32)
        qkv_ref[...] = qkv.astype(compute_dtype)

    # --- rows of this query tile --------------------------------------------
    if q_tile == n_seq:
        q_rows = pl.ds(0, n_seq)
    else:
        q_rows = pl.ds(pl.multiple_of(qi * q_tile, q_tile), q_tile)

    # --- per-head attention, accumulating the output projection in f32 ------
    acc = jnp.zeros((q_tile, c_dim), jnp.float32)
    for h in range(h_cnt):                      # static unroll; H is small
        c0_q = 0 * c_dim + h * d_hd
        c0_k = 1 * c_dim + h * d_hd
        c0_v = 2 * c_dim + h * d_hd
        q_h = qkv_ref[q_rows, c0_q:c0_q + d_hd]                       # (tq, D)
        k_h = qkv_ref[:, c0_k:c0_k + d_hd]                            # (N,  D)
        v_h = qkv_ref[:, c0_v:c0_v + d_hd]                            # (N,  D)

        # scores without a materialized transpose: contract D of q and k.
        s = jax.lax.dot_general(
            q_h, k_h, dimension_numbers=(((1,), (1,)), ((), ())),
            preferred_element_type=jnp.float32)                       # (tq, N)

        # numerically stable softmax in f32
        s = s - jnp.max(s, axis=-1, keepdims=True)
        p = jnp.exp(s)
        inv_l = pl.reciprocal(jnp.sum(p, axis=-1, keepdims=True), approx=True)

        # context; normalization folded after the matmul (tq*D mults, not tq*N)
        ctx = jnp.dot(p.astype(compute_dtype), v_h,
                      preferred_element_type=jnp.float32) * inv_l     # (tq, D)

        # head h's slice of the output projection (rows h*D:(h+1)*D).
        # Accumulating over heads replaces the transpose(1,2).reshape concat.
        acc = acc + jnp.dot(ctx.astype(compute_dtype),
                            wproj_ref[h * d_hd:(h + 1) * d_hd, :],
                            preferred_element_type=jnp.float32)       # (tq, C)

    # proj bias; attn_drop / proj_drop are Dropout(0.0) -> identity.
    o_ref[0] = (acc + bproj_ref[...]).astype(o_ref.dtype)


def attention_forward(x, params, *, num_heads, out_dim=None, qk_scale=None,
                      compute_dtype=jnp.bfloat16):
    """Forward pass matching PyTorch Attention.forward.  x: (B, N, dim)."""
    if out_dim is not None:
        # `xianxing` pre-projection: plain-JAX glue (simple linear), dim := out_dim.
        x = jnp.einsum("bnc,co->bno", x, params["w_xianxing"]) + params["b_xianxing"]

    B, N, C = x.shape
    H = num_heads
    assert C % H == 0, "dim must be divisible by num_heads"
    D = C // H
    scale = qk_scale if qk_scale is not None else D ** (-0.5)
    cd = compute_dtype

    # Fold the softmax scale into the Q columns of the fused QKV weight/bias
    # (constant-folded under jit): (x@Wq + bq)*scale == x@(Wq*scale) + bq*scale.
    scale_vec = jnp.concatenate(
        [jnp.full((C,), scale, jnp.float32), jnp.ones((2 * C,), jnp.float32)]
    )[None, :]                                                      # (1, 3C)
    w_qkv = (params["w_qkv"].astype(jnp.float32) * scale_vec).astype(cd)   # (C, 3C)
    b_qkv = params.get("b_qkv", None)
    if b_qkv is None:
        b_qkv = jnp.zeros((1, 3 * C), jnp.float32)
    else:
        b_qkv = b_qkv.reshape(1, 3 * C).astype(jnp.float32) * scale_vec
    w_p = params["w_proj"].astype(cd)                               # (C, C)
    b_p = params["b_proj"].reshape(1, C).astype(jnp.float32)        # (1, C)
    x_c = x.astype(cd)

    vmem_cap = _vmem_capacity_bytes()
    tq = _choose_q_tile(N, vmem_cap)
    num_q = N // tq

    kernel = functools.partial(_attention_kernel, num_heads=H, head_dim=D,
                               q_tile=tq, compute_dtype=cd)

    return pl.pallas_call(
        kernel,
        out_shape=jax.ShapeDtypeStruct((B, N, C), x.dtype),
        grid_spec=pltpu.PrefetchScalarGridSpec(
            num_scalar_prefetch=0,
            grid=(B, num_q),
            in_specs=[
                # full sequence for batch b; block index only changes with b,
                # so it is DMA'd once per batch element.
                pl.BlockSpec((1, N, C), lambda b, qi: (b, 0, 0)),
                # fused QKV weight / bias and proj weight / bias: constant
                # index_map => resident in VMEM, DMA'd once for the whole grid.
                pl.BlockSpec((C, 3 * C), lambda b, qi: (0, 0)),
                pl.BlockSpec((1, 3 * C), lambda b, qi: (0, 0)),
                pl.BlockSpec((C, C), lambda b, qi: (0, 0)),
                pl.BlockSpec((1, C), lambda b, qi: (0, 0)),
            ],
            out_specs=pl.BlockSpec((1, tq, C), lambda b, qi: (b, qi, 0)),
            # per-batch QKV cache (compute dtype), persistent across q tiles.
            scratch_shapes=[pltpu.VMEM((N, 3 * C), cd)],
        ),
        compiler_params=pltpu.CompilerParams(
            # batch axis parallel (megacore); query-tile axis must be
            # sequential ("arbitrary") so the qi==0 cache fill precedes reuse.
            dimension_semantics=("parallel", "arbitrary"),
            vmem_limit_bytes=_vmem_limit_bytes(vmem_cap),
        ),
    )(x_c, w_qkv, b_qkv, w_p, b_p)


def init_params(key, dim, num_heads, out_dim=None, qkv_bias=False):
    """Deterministic synthetic parameter init matching the module's shapes."""
    keys = jax.random.split(key, 7)
    params = {}
    d = dim
    if out_dim is not None:
        params["w_xianxing"] = jax.random.normal(keys[4], (dim, out_dim), jnp.float32) * 0.02
        params["b_xianxing"] = jax.random.normal(keys[5], (1, out_dim), jnp.float32) * 0.02
        d = out_dim
    # qkv: Linear(d, 3d, bias=qkv_bias); stored as (in, out)
    params["w_qkv"] = jax.random.normal(keys[0], (d, 3 * d), jnp.float32) * 0.02
    if qkv_bias:
        params["b_qkv"] = jax.random.normal(keys[6], (1, 3 * d), jnp.float32) * 0.02
    # proj: Linear(d, d) with bias; stored as (in, out)
    params["w_proj"] = jax.random.normal(keys[1], (d, d), jnp.float32) * 0.02
    params["b_proj"] = jax.random.normal(keys[2], (1, d), jnp.float32) * 0.02
    return params


def attention_reference(x, params, *, num_heads, out_dim=None, qk_scale=None):
    """Pure-JAX f32 reference replicating the PyTorch forward exactly."""
    if out_dim is not None:
        x = jnp.einsum("bnc,co->bno", x, params["w_xianxing"]) + params["b_xianxing"]
    B, N, C = x.shape
    H = num_heads
    D = C // H
    scale = qk_scale if qk_scale is not None else D ** (-0.5)

    qkv = jnp.einsum("bnc,cd->bnd", x, params["w_qkv"])          # (B, N, 3C)
    if "b_qkv" in params:
        qkv = qkv + params["b_qkv"]
    qkv = qkv.reshape(B, N, 3, H, D).transpose(2, 0, 3, 1, 4)    # (3, B, H, N, D)
    q, k, v = qkv[0], qkv[1], qkv[2]
    attn = jnp.einsum("bhnd,bhmd->bhnm", q, k) * scale
    attn = jax.nn.softmax(attn, axis=-1)
    ctx = jnp.einsum("bhnm,bhmd->bhnd", attn, v)                 # (B, H, N, D)
    ctx = ctx.transpose(0, 2, 1, 3).reshape(B, N, C)
    return jnp.einsum("bnc,cd->bnd", ctx, params["w_proj"]) + params["b_proj"]


def _check(name, x, params, *, num_heads, out_dim=None, qk_scale=None):
    out = attention_forward(x, params, num_heads=num_heads, out_dim=out_dim,
                            qk_scale=qk_scale)
    out = jax.block_until_ready(out)
    ref = attention_reference(x, params, num_heads=num_heads, out_dim=out_dim,
                              qk_scale=qk_scale)
    assert out.shape == ref.shape, f"{name}: shape {out.shape} vs {ref.shape}"
    max_err = float(jnp.max(jnp.abs(out - ref)))
    # bf16 MXU operands + approx reciprocal => loose-but-safe tolerance.
    assert jnp.allclose(out, ref, atol=2e-2, rtol=2e-2), (
        f"{name}: mismatch vs reference (max|err|={max_err})")


if __name__ == "__main__":
    # Small shapes consistent with the module: B=2, N=16 (seq), dim=64, heads=8.
    key = jax.random.PRNGKey(0)
    k_x1, k_p1, k_x2, k_p2 = jax.random.split(key, 4)

    # Case 1: default Attention(dim) usage (qkv_bias=False, out_dim=None).
    B, N, DIM, HEADS = 2, 16, 64, 8
    x1 = jax.random.normal(k_x1, (B, N, DIM), jnp.float32)
    p1 = init_params(k_p1, DIM, HEADS)
    _check("default", x1, p1, num_heads=HEADS)

    # Case 2: out_dim (xianxing pre-projection) + qkv_bias=True.
    IN_DIM, OUT_DIM = 48, 64
    x2 = jax.random.normal(k_x2, (B, N, IN_DIM), jnp.float32)
    p2 = init_params(k_p2, IN_DIM, HEADS, out_dim=OUT_DIM, qkv_bias=True)
    _check("xianxing+bias", x2, p2, num_heads=HEADS, out_dim=OUT_DIM)

    # TODO(synk): torch.cuda.empty_cache() has no JAX/TPU equivalent (no-op here).
    print("KERNEL_OK")
</pallas_src>

<mosaic_0001>
module attributes {stable_mosaic.version = 11 : i64} {
  func.func @_attention_kernel(%arg0: i32, %arg1: i32, %arg2: memref<1x16x64xbf16, #tpu.memory_space<vmem>>, %arg3: memref<64x192xbf16, #tpu.memory_space<vmem>>, %arg4: memref<1x192xf32, #tpu.memory_space<vmem>>, %arg5: memref<64x64xbf16, #tpu.memory_space<vmem>>, %arg6: memref<1x64xf32, #tpu.memory_space<vmem>>, %arg7: memref<1x16x64xf32, #tpu.memory_space<vmem>>, %arg8: memref<16x192xbf16, #tpu.memory_space<vmem>>) attributes {dimension_semantics = [#tpu.dimension_semantics<parallel>, #tpu.dimension_semantics<arbitrary>], iteration_bounds = array<i64: 2, 1>, scalar_prefetch = 0 : i64, scratch_operands = 1 : i64, tpu.core_type = #tpu.core_type<tc>, window_params = [{transform_indices = @transform_0, window_bounds = array<i64: 1, 16, 64>}, {pipeline_mode = #tpu.pipeline_mode<synchronous>, transform_indices = @transform_1, window_bounds = array<i64: 64, 192>}, {pipeline_mode = #tpu.pipeline_mode<synchronous>, transform_indices = @transform_2, window_bounds = array<i64: 1, 192>}, {pipeline_mode = #tpu.pipeline_mode<synchronous>, transform_indices = @transform_3, window_bounds = array<i64: 64, 64>}, {pipeline_mode = #tpu.pipeline_mode<synchronous>, transform_indices = @transform_4, window_bounds = array<i64: 1, 64>}, {transform_indices = @transform_5, window_bounds = array<i64: 1, 16, 64>}]} {
    %c0_i32 = arith.constant 0 : i32
    %0 = arith.cmpi eq, %arg1, %c0_i32 : i32
    %1 = arith.extui %0 : i1 to i32
    %c0_i32_0 = arith.constant 0 : i32
    %2 = arith.cmpi ne, %1, %c0_i32_0 : i32
    scf.if %2 {
      %c0_86 = arith.constant 0 : index
      %c0_87 = arith.constant 0 : index
      %c0_88 = arith.constant 0 : index
      %170 = vector.load %arg2[%c0_86, %c0_87, %c0_88] : memref<1x16x64xbf16, #tpu.memory_space<vmem>>, vector<1x16x64xbf16>
      %171 = vector.shape_cast %170 : vector<1x16x64xbf16> to vector<16x64xbf16>
      %c0_89 = arith.constant 0 : index
      %c0_90 = arith.constant 0 : index
      %172 = vector.load %arg3[%c0_89, %c0_90] : memref<64x192xbf16, #tpu.memory_space<vmem>>, vector<64x192xbf16>
      %cst_91 = arith.constant dense<0.000000e+00> : vector<16x192xf32>
      %173 = tpu.matmul %171, %172, %cst_91 {dimension_numbers = #tpu.dot_dimension_numbers<[1], [0], [0], [1], [0, 0, 1, 1], [], []>} : vector<16x64xbf16>, vector<64x192xbf16>, vector<16x192xf32> -> vector<16x192xf32>
      %c0_92 = arith.constant 0 : index
      %c0_93 = arith.constant 0 : index
      %174 = vector.load %arg4[%c0_92, %c0_93] : memref<1x192xf32, #tpu.memory_space<vmem>>, vector<1x192xf32>
      %175 = vector.broadcast %174 : vector<1x192xf32> to vector<16x192xf32>
      %176 = arith.addf %173, %175 : vector<16x192xf32>
      %177 = arith.truncf %176 : vector<16x192xf32> to vector<16x192xbf16>
      %c0_94 = arith.constant 0 : index
      %c0_95 = arith.constant 0 : index
      %178 = vector.load %arg8[%c0_94, %c0_95] : memref<16x192xbf16, #tpu.memory_space<vmem>>, vector<16x192xbf16>
      tpu.vector_store %arg8[%c0_94, %c0_95], %177 {strides = array<i32>} : memref<16x192xbf16, #tpu.memory_space<vmem>>, vector<16x192xbf16>,
    } else {
    }
    %cst = arith.constant 0.000000e+00 : f32
    %3 = vector.broadcast %cst : f32 to vector<16x64xf32>
    %c0 = arith.constant 0 : index
    %c0_1 = arith.constant 0 : index
    %4 = vector.load %arg8[%c0, %c0_1] : memref<16x192xbf16, #tpu.memory_space<vmem>>, vector<16x8xbf16>
    %c0_2 = arith.constant 0 : index
    %c64 = arith.constant 64 : index
    %5 = vector.load %arg8[%c0_2, %c64] : memref<16x192xbf16, #tpu.memory_space<vmem>>, vector<16x8xbf16>
    %c0_3 = arith.constant 0 : index
    %c128 = arith.constant 128 : index
    %6 = vector.load %arg8[%c0_3, %c128] : memref<16x192xbf16, #tpu.memory_space<vmem>>, vector<16x8xbf16>
    %cst_4 = arith.constant dense<0.000000e+00> : vector<16x16xf32>
    %7 = tpu.matmul %4, %5, %cst_4 {dimension_numbers = #tpu.dot_dimension_numbers<[1], [1], [0], [0], [0, 0, 1, 0], [], []>} : vector<16x8xbf16>, vector<16x8xbf16>, vector<16x16xf32> -> vector<16x16xf32>
    %cst_5 = arith.constant dense<0xFF800000> : vector<16xf32>
    %8 = vector.multi_reduction <maximumf>, %7, %cst_5 [1] : vector<16x16xf32> to vector<16xf32>
    %9 = vector.shape_cast %8 : vector<16xf32> to vector<16x1xf32>
    %10 = vector.broadcast %9 : vector<16x1xf32> to vector<16x16xf32>
    %11 = arith.subf %7, %10 : vector<16x16xf32>
    %12 = math.exp %11 : vector<16x16xf32>
    %cst_6 = arith.constant dense<0.000000e+00> : vector<16xf32>
    %13 = vector.multi_reduction <add>, %12, %cst_6 [1] : vector<16x16xf32> to vector<16xf32>
    %14 = vector.shape_cast %13 : vector<16xf32> to vector<16x1xf32>
    %15 = tpu.reciprocal %14 {approx = true} : vector<16x1xf32> -> vector<16x1xf32>
    %16 = arith.truncf %12 : vector<16x16xf32> to vector<16x16xbf16>
    %cst_7 = arith.constant dense<0.000000e+00> : vector<16x8xf32>
    %17 = tpu.matmul %16, %6, %cst_7 {dimension_numbers = #tpu.dot_dimension_numbers<[1], [0], [0], [1], [0, 0, 1, 1], [], []>} : vector<16x16xbf16>, vector<16x8xbf16>, vector<16x8xf32> -> vector<16x8xf32>
    %18 = vector.broadcast %15 : vector<16x1xf32> to vector<16x8xf32>
    %19 = arith.mulf %17, %18 : vector<16x8xf32>
    %20 = arith.truncf %19 : vector<16x8xf32> to vector<16x8xbf16>
    %c0_8 = arith.constant 0 : index
    %c0_9 = arith.constant 0 : index
    %21 = vector.load %arg5[%c0_8, %c0_9] : memref<64x64xbf16, #tpu.memory_space<vmem>>, vector<8x64xbf16>
    %cst_10 = arith.constant dense<0.000000e+00> : vector<16x64xf32>
    %22 = tpu.matmul %20, %21, %cst_10 {dimension_numbers = #tpu.dot_dimension_numbers<[1], [0], [0], [1], [0, 0, 1, 1], [], []>} : vector<16x8xbf16>, vector<8x64xbf16>, vector<16x64xf32> -> vector<16x64xf32>
    %23 = arith.addf %3, %22 : vector<16x64xf32>
    %c0_11 = arith.constant 0 : index
    %c8 = arith.constant 8 : index
    %24 = vector.load %arg8[%c0_11, %c8] : memref<16x192xbf16, #tpu.memory_space<vmem>>, vector<16x8xbf16>
    %c0_12 = arith.constant 0 : index
    %c72 = arith.constant 72 : index
    %25 = vector.load %arg8[%c0_12, %c72] : memref<16x192xbf16, #tpu.memory_space<vmem>>, vector<16x8xbf16>
    %c0_13 = arith.constant 0 : index
    %c136 = arith.constant 136 : index
    %26 = vector.load %arg8[%c0_13, %c136] : memref<16x192xbf16, #tpu.memory_space<vmem>>, vector<16x8xbf16>
    %cst_14 = arith.constant dense<0.000000e+00> : vector<16x16xf32>
    %27 = tpu.matmul %24, %25, %cst_14 {dimension_numbers = #tpu.dot_dimension_numbers<[1], [1], [0], [0], [0, 0, 1, 0], [], []>} : vector<16x8xbf16>, vector<16x8xbf16>, vector<16x16xf32> -> vector<16x16xf32>
    %cst_15 = arith.constant dense<0xFF800000> : vector<16xf32>
    %28 = vector.multi_reduction <maximumf>, %27, %cst_15 [1] : vector<16x16xf32> to vector<16xf32>
    %29 = vector.shape_cast %28 : vector<16xf32> to vector<16x1xf32>
    %30 = vector.broadcast %29 : vector<16x1xf32> to vector<16x16xf32>
    %31 = arith.subf %27, %30 : vector<16x16xf32>
    %32 = math.exp %31 : vector<16x16xf32>
    %cst_16 = arith.constant dense<0.000000e+00> : vector<16xf32>
    %33 = vector.multi_reduction <add>, %32, %cst_16 [1] : vector<16x16xf32> to vector<16xf32>
    %34 = vector.shape_cast %33 : vector<16xf32> to vector<16x1xf32>
    %35 = tpu.reciprocal %34 {approx = true} : vector<16x1xf32> -> vector<16x1xf32>
    %36 = arith.truncf %32 : vector<16x16xf32> to vector<16x16xbf16>
    %cst_17 = arith.constant dense<0.000000e+00> : vector<16x8xf32>
    %37 = tpu.matmul %36, %26, %cst_17 {dimension_numbers = #tpu.dot_dimension_numbers<[1], [0], [0], [1], [0, 0, 1, 1], [], []>} : vector<16x16xbf16>, vector<16x8xbf16>, vector<16x8xf32> -> vector<16x8xf32>
    %38 = vector.broadcast %35 : vector<16x1xf32> to vector<16x8xf32>
    %39 = arith.mulf %37, %38 : vector<16x8xf32>
    %40 = arith.truncf %39 : vector<16x8xf32> to vector<16x8xbf16>
    %c8_18 = arith.constant 8 : index
    %c0_19 = arith.constant 0 : index
    %41 = vector.load %arg5[%c8_18, %c0_19] : memref<64x64xbf16, #tpu.memory_space<vmem>>, vector<8x64xbf16>
    %cst_20 = arith.constant dense<0.000000e+00> : vector<16x64xf32>
    %42 = tpu.matmul %40, %41, %cst_20 {dimension_numbers = #tpu.dot_dimension_numbers<[1], [0], [0], [1], [0, 0, 1, 1], [], []>} : vector<16x8xbf16>, vector<8x64xbf16>, vector<16x64xf32> -> vector<16x64xf32>
    %43 = arith.addf %23, %42 : vector<16x64xf32>
    %c0_21 = arith.constant 0 : index
    %c16 = arith.constant 16 : index
    %44 = vector.load %arg8[%c0_21, %c16] : memref<16x192xbf16, #tpu.memory_space<vmem>>, vector<16x8xbf16>
    %c0_22 = arith.constant 0 : index
    %c80 = arith.constant 80 : index
    %45 = vector.load %arg8[%c0_22, %c80] : memref<16x192xbf16, #tpu.memory_space<vmem>>, vector<16x8xbf16>
    %c0_23 = arith.constant 0 : index
    %c144 = arith.constant 144 : index
    %46 = vector.load %arg8[%c0_23, %c144] : memref<16x192xbf16, #tpu.memory_space<vmem>>, vector<16x8xbf16>
    %cst_24 = arith.constant dense<0.000000e+00> : vector<16x16xf32>
    %47 = tpu.matmul %44, %45, %cst_24 {dimension_numbers = #tpu.dot_dimension_numbers<[1], [1], [0], [0], [0, 0, 1, 0], [], []>} : vector<16x8xbf16>, vector<16x8xbf16>, vector<16x16xf32> -> vector<16x16xf32>
    %cst_25 = arith.constant dense<0xFF800000> : vector<16xf32>
    %48 = vector.multi_reduction <maximumf>, %47, %cst_25 [1] : vector<16x16xf32> to vector<16xf32>
    %49 = vector.shape_cast %48 : vector<16xf32> to vector<16x1xf32>
    %50 = vector.broadcast %49 : vector<16x1xf32> to vector<16x16xf32>
    %51 = arith.subf %47, %50 : vector<16x16xf32>
    %52 = math.exp %51 : vector<16x16xf32>
    %cst_26 = arith.constant dense<0.000000e+00> : vector<16xf32>
    %53 = vector.multi_reduction <add>, %52, %cst_26 [1] : vector<16x16xf32> to vector<16xf32>
    %54 = vector.shape_cast %53 : vector<16xf32> to vector<16x1xf32>
    %55 = tpu.reciprocal %54 {approx = true} : vector<16x1xf32> -> vector<16x1xf32>
    %56 = arith.truncf %52 : vector<16x16xf32> to vector<16x16xbf16>
    %cst_27 = arith.constant dense<0.000000e+00> : vector<16x8xf32>
    %57 = tpu.matmul %56, %46, %cst_27 {dimension_numbers = #tpu.dot_dimension_numbers<[1], [0], [0], [1], [0, 0, 1, 1], [], []>} : vector<16x16xbf16>, vector<16x8xbf16>, vector<16x8xf32> -> vector<16x8xf32>
    %58 = vector.broadcast %55 : vector<16x1xf32> to vector<16x8xf32>
    %59 = arith.mulf %57, %58 : vector<16x8xf32>
    %60 = arith.truncf %59 : vector<16x8xf32> to vector<16x8xbf16>
    %c16_28 = arith.constant 16 : index
    %c0_29 = arith.constant 0 : index
    %61 = vector.load %arg5[%c16_28, %c0_29] : memref<64x64xbf16, #tpu.memory_space<vmem>>, vector<8x64xbf16>
    %cst_30 = arith.constant dense<0.000000e+00> : vector<16x64xf32>
    %62 = tpu.matmul %60, %61, %cst_30 {dimension_numbers = #tpu.dot_dimension_numbers<[1], [0], [0], [1], [0, 0, 1, 1], [], []>} : vector<16x8xbf16>, vector<8x64xbf16>, vector<16x64xf32> -> vector<16x64xf32>
    %63 = arith.addf %43, %62 : vector<16x64xf32>
    %c0_31 = arith.constant 0 : index
    %c24 = arith.constant 24 : index
    %64 = vector.load %arg8[%c0_31, %c24] : memref<16x192xbf16, #tpu.memory_space<vmem>>, vector<16x8xbf16>
    %c0_32 = arith.constant 0 : index
    %c88 = arith.constant 88 : index
    %65 = vector.load %arg8[%c0_32, %c88] : memref<16x192xbf16, #tpu.memory_space<vmem>>, vector<16x8xbf16>
    %c0_33 = arith.constant 0 : index
    %c152 = arith.constant 152 : index
    %66 = vector.load %arg8[%c0_33, %c152] : memref<16x192xbf16, #tpu.memory_space<vmem>>, vector<16x8xbf16>
    %cst_34 = arith.constant dense<0.000000e+00> : vector<16x16xf32>
    %67 = tpu.matmul %64, %65, %cst_34 {dimension_numbers = #tpu.dot_dimension_numbers<[1], [1], [0], [0], [0, 0, 1, 0], [], []>} : vector<16x8xbf16>, vector<16x8xbf16>, vector<16x16xf32> -> vector<16x16xf32>
    %cst_35 = arith.constant dense<0xFF800000> : vector<16xf32>
    %68 = vector.multi_reduction <maximumf>, %67, %cst_35 [1] : vector<16x16xf32> to vector<16xf32>
    %69 = vector.shape_cast %68 : vector<16xf32> to vector<16x1xf32>
    %70 = vector.broadcast %69 : vector<16x1xf32> to vector<16x16xf32>
    %71 = arith.subf %67, %70 : vector<16x16xf32>
    %72 = math.exp %71 : vector<16x16xf32>
    %cst_36 = arith.constant dense<0.000000e+00> : vector<16xf32>
    %73 = vector.multi_reduction <add>, %72, %cst_36 [1] : vector<16x16xf32> to vector<16xf32>
    %74 = vector.shape_cast %73 : vector<16xf32> to vector<16x1xf32>
    %75 = tpu.reciprocal %74 {approx = true} : vector<16x1xf32> -> vector<16x1xf32>
    %76 = arith.truncf %72 : vector<16x16xf32> to vector<16x16xbf16>
    %cst_37 = arith.constant dense<0.000000e+00> : vector<16x8xf32>
    %77 = tpu.matmul %76, %66, %cst_37 {dimension_numbers = #tpu.dot_dimension_numbers<[1], [0], [0], [1], [0, 0, 1, 1], [], []>} : vector<16x16xbf16>, vector<16x8xbf16>, vector<16x8xf32> -> vector<16x8xf32>
    %78 = vector.broadcast %75 : vector<16x1xf32> to vector<16x8xf32>
    %79 = arith.mulf %77, %78 : vector<16x8xf32>
    %80 = arith.truncf %79 : vector<16x8xf32> to vector<16x8xbf16>
    %c24_38 = arith.constant 24 : index
    %c0_39 = arith.constant 0 : index
    %81 = vector.load %arg5[%c24_38, %c0_39] : memref<64x64xbf16, #tpu.memory_space<vmem>>, vector<8x64xbf16>
    %cst_40 = arith.constant dense<0.000000e+00> : vector<16x64xf32>
    %82 = tpu.matmul %80, %81, %cst_40 {dimension_numbers = #tpu.dot_dimension_numbers<[1], [0], [0], [1], [0, 0, 1, 1], [], []>} : vector<16x8xbf16>, vector<8x64xbf16>, vector<16x64xf32> -> vector<16x64xf32>
    %83 = arith.addf %63, %82 : vector<16x64xf32>
    %c0_41 = arith.constant 0 : index
    %c32 = arith.constant 32 : index
    %84 = vector.load %arg8[%c0_41, %c32] : memref<16x192xbf16, #tpu.memory_space<vmem>>, vector<16x8xbf16>
    %c0_42 = arith.constant 0 : index
    %c96 = arith.constant 96 : index
    %85 = vector.load %arg8[%c0_42, %c96] : memref<16x192xbf16, #tpu.memory_space<vmem>>, vector<16x8xbf16>
    %c0_43 = arith.constant 0 : index
    %c160 = arith.constant 160 : index
    %86 = vector.load %arg8[%c0_43, %c160] : memref<16x192xbf16, #tpu.memory_space<vmem>>, vector<16x8xbf16>
    %cst_44 = arith.constant dense<0.000000e+00> : vector<16x16xf32>
    %87 = tpu.matmul %84, %85, %cst_44 {dimension_numbers = #tpu.dot_dimension_numbers<[1], [1], [0], [0], [0, 0, 1, 0], [], []>} : vector<16x8xbf16>, vector<16x8xbf16>, vector<16x16xf32> -> vector<16x16xf32>
    %cst_45 = arith.constant dense<0xFF800000> : vector<16xf32>
    %88 = vector.multi_reduction <maximumf>, %87, %cst_45 [1] : vector<16x16xf32> to vector<16xf32>
    %89 = vector.shape_cast %88 : vector<16xf32> to vector<16x1xf32>
    %90 = vector.broadcast %89 : vector<16x1xf32> to vector<16x16xf32>
    %91 = arith.subf %87, %90 : vector<16x16xf32>
    %92 = math.exp %91 : vector<16x16xf32>
    %cst_46 = arith.constant dense<0.000000e+00> : vector<16xf32>
    %93 = vector.multi_reduction <add>, %92, %cst_46 [1] : vector<16x16xf32> to vector<16xf32>
    %94 = vector.shape_cast %93 : vector<16xf32> to vector<16x1xf32>
    %95 = tpu.reciprocal %94 {approx = true} : vector<16x1xf32> -> vector<16x1xf32>
    %96 = arith.truncf %92 : vector<16x16xf32> to vector<16x16xbf16>
    %cst_47 = arith.constant dense<0.000000e+00> : vector<16x8xf32>
    %97 = tpu.matmul %96, %86, %cst_47 {dimension_numbers = #tpu.dot_dimension_numbers<[1], [0], [0], [1], [0, 0, 1, 1], [], []>} : vector<16x16xbf16>, vector<16x8xbf16>, vector<16x8xf32> -> vector<16x8xf32>
    %98 = vector.broadcast %95 : vector<16x1xf32> to vector<16x8xf32>
    %99 = arith.mulf %97, %98 : vector<16x8xf32>
    %100 = arith.truncf %99 : vector<16x8xf32> to vector<16x8xbf16>
    %c32_48 = arith.constant 32 : index
    %c0_49 = arith.constant 0 : index
    %101 = vector.load %arg5[%c32_48, %c0_49] : memref<64x64xbf16, #tpu.memory_space<vmem>>, vector<8x64xbf16>
    %cst_50 = arith.constant dense<0.000000e+00> : vector<16x64xf32>
    %102 = tpu.matmul %100, %101, %cst_50 {dimension_numbers = #tpu.dot_dimension_numbers<[1], [0], [0], [1], [0, 0, 1, 1], [], []>} : vector<16x8xbf16>, vector<8x64xbf16>, vector<16x64xf32> -> vector<16x64xf32>
    %103 = arith.addf %83, %102 : vector<16x64xf32>
    %c0_51 = arith.constant 0 : index
    %c40 = arith.constant 40 : index
    %104 = vector.load %arg8[%c0_51, %c40] : memref<16x192xbf16, #tpu.memory_space<vmem>>, vector<16x8xbf16>
    %c0_52 = arith.constant 0 : index
    %c104 = arith.constant 104 : index
    %105 = vector.load %arg8[%c0_52, %c104] : memref<16x192xbf16, #tpu.memory_space<vmem>>, vector<16x8xbf16>
    %c0_53 = arith.constant 0 : index
    %c168 = arith.constant 168 : index
    %106 = vector.load %arg8[%c0_53, %c168] : memref<16x192xbf16, #tpu.memory_space<vmem>>, vector<16x8xbf16>
    %cst_54 = arith.constant dense<0.000000e+00> : vector<16x16xf32>
    %107 = tpu.matmul %104, %105, %cst_54 {dimension_numbers = #tpu.dot_dimension_numbers<[1], [1], [0], [0], [0, 0, 1, 0], [], []>} : vector<16x8xbf16>, vector<16x8xbf16>, vector<16x16xf32> -> vector<16x16xf32>
    %cst_55 = arith.constant dense<0xFF800000> : vector<16xf32>
    %108 = vector.multi_reduction <maximumf>, %107, %cst_55 [1] : vector<16x16xf32> to vector<16xf32>
    %109 = vector.shape_cast %108 : vector<16xf32> to vector<16x1xf32>
    %110 = vector.broadcast %109 : vector<16x1xf32> to vector<16x16xf32>
    %111 = arith.subf %107, %110 : vector<16x16xf32>
    %112 = math.exp %111 : vector<16x16xf32>
    %cst_56 = arith.constant dense<0.000000e+00> : vector<16xf32>
    %113 = vector.multi_reduction <add>, %112, %cst_56 [1] : vector<16x16xf32> to vector<16xf32>
    %114 = vector.shape_cast %113 : vector<16xf32> to vector<16x1xf32>
    %115 = tpu.reciprocal %114 {approx = true} : vector<16x1xf32> -> vector<16x1xf32>
    %116 = arith.truncf %112 : vector<16x16xf32> to vector<16x16xbf16>
    %cst_57 = arith.constant dense<0.000000e+00> : vector<16x8xf32>
    %117 = tpu.matmul %116, %106, %cst_57 {dimension_numbers = #tpu.dot_dimension_numbers<[1], [0], [0], [1], [0, 0, 1, 1], [], []>} : vector<16x16xbf16>, vector<16x8xbf16>, vector<16x8xf32> -> vector<16x8xf32>
    %118 = vector.broadcast %115 : vector<16x1xf32> to vector<16x8xf32>
    %119 = arith.mulf %117, %118 : vector<16x8xf32>
    %120 = arith.truncf %119 : vector<16x8xf32> to vector<16x8xbf16>
    %c40_58 = arith.constant 40 : index
    %c0_59 = arith.constant 0 : index
    %121 = vector.load %arg5[%c40_58, %c0_59] : memref<64x64xbf16, #tpu.memory_space<vmem>>, vector<8x64xbf16>
    %cst_60 = arith.constant dense<0.000000e+00> : vector<16x64xf32>
    %122 = tpu.matmul %120, %121, %cst_60 {dimension_numbers = #tpu.dot_dimension_numbers<[1], [0], [0], [1], [0, 0, 1, 1], [], []>} : vector<16x8xbf16>, vector<8x64xbf16>, vector<16x64xf32> -> vector<16x64xf32>
    %123 = arith.addf %103, %122 : vector<16x64xf32>
    %c0_61 = arith.constant 0 : index
    %c48 = arith.constant 48 : index
    %124 = vector.load %arg8[%c0_61, %c48] : memref<16x192xbf16, #tpu.memory_space<vmem>>, vector<16x8xbf16>
    %c0_62 = arith.constant 0 : index
    %c112 = arith.constant 112 : index
    %125 = vector.load %arg8[%c0_62, %c112] : memref<16x192xbf16, #tpu.memory_space<vmem>>, vector<16x8xbf16>
    %c0_63 = arith.constant 0 : index
    %c176 = arith.constant 176 : index
    %126 = vector.load %arg8[%c0_63, %c176] : memref<16x192xbf16, #tpu.memory_space<vmem>>, vector<16x8xbf16>
    %cst_64 = arith.constant dense<0.000000e+00> : vector<16x16xf32>
    %127 = tpu.matmul %124, %125, %cst_64 {dimension_numbers = #tpu.dot_dimension_numbers<[1], [1], [0], [0], [0, 0, 1, 0], [], []>} : vector<16x8xbf16>, vector<16x8xbf16>, vector<16x16xf32> -> vector<16x16xf32>
    %cst_65 = arith.constant dense<0xFF800000> : vector<16xf32>
    %128 = vector.multi_reduction <maximumf>, %127, %cst_65 [1] : vector<16x16xf32> to vector<16xf32>
    %129 = vector.shape_cast %128 : vector<16xf32> to vector<16x1xf32>
    %130 = vector.broadcast %129 : vector<16x1xf32> to vector<16x16xf32>
    %131 = arith.subf %127, %130 : vector<16x16xf32>
    %132 = math.exp %131 : vector<16x16xf32>
    %cst_66 = arith.constant dense<0.000000e+00> : vector<16xf32>
    %133 = vector.multi_reduction <add>, %132, %cst_66 [1] : vector<16x16xf32> to vector<16xf32>
    %134 = vector.shape_cast %133 : vector<16xf32> to vector<16x1xf32>
    %135 = tpu.reciprocal %134 {approx = true} : vector<16x1xf32> -> vector<16x1xf32>
    %136 = arith.truncf %132 : vector<16x16xf32> to vector<16x16xbf16>
    %cst_67 = arith.constant dense<0.000000e+00> : vector<16x8xf32>
    %137 = tpu.matmul %136, %126, %cst_67 {dimension_numbers = #tpu.dot_dimension_numbers<[1], [0], [0], [1], [0, 0, 1, 1], [], []>} : vector<16x16xbf16>, vector<16x8xbf16>, vector<16x8xf32> -> vector<16x8xf32>
    %138 = vector.broadcast %135 : vector<16x1xf32> to vector<16x8xf32>
    %139 = arith.mulf %137, %138 : vector<16x8xf32>
    %140 = arith.truncf %139 : vector<16x8xf32> to vector<16x8xbf16>
    %c48_68 = arith.constant 48 : index
    %c0_69 = arith.constant 0 : index
    %141 = vector.load %arg5[%c48_68, %c0_69] : memref<64x64xbf16, #tpu.memory_space<vmem>>, vector<8x64xbf16>
    %cst_70 = arith.constant dense<0.000000e+00> : vector<16x64xf32>
    %142 = tpu.matmul %140, %141, %cst_70 {dimension_numbers = #tpu.dot_dimension_numbers<[1], [0], [0], [1], [0, 0, 1, 1], [], []>} : vector<16x8xbf16>, vector<8x64xbf16>, vector<16x64xf32> -> vector<16x64xf32>
    %143 = arith.addf %123, %142 : vector<16x64xf32>
    %c0_71 = arith.constant 0 : index
    %c56 = arith.constant 56 : index
    %144 = vector.load %arg8[%c0_71, %c56] : memref<16x192xbf16, #tpu.memory_space<vmem>>, vector<16x8xbf16>
    %c0_72 = arith.constant 0 : index
    %c120 = arith.constant 120 : index
    %145 = vector.load %arg8[%c0_72, %c120] : memref<16x192xbf16, #tpu.memory_space<vmem>>, vector<16x8xbf16>
    %c0_73 = arith.constant 0 : index
    %c184 = arith.constant 184 : index
    %146 = vector.load %arg8[%c0_73, %c184] : memref<16x192xbf16, #tpu.memory_space<vmem>>, vector<16x8xbf16>
    %cst_74 = arith.constant dense<0.000000e+00> : vector<16x16xf32>
    %147 = tpu.matmul %144, %145, %cst_74 {dimension_numbers = #tpu.dot_dimension_numbers<[1], [1], [0], [0], [0, 0, 1, 0], [], []>} : vector<16x8xbf16>, vector<16x8xbf16>, vector<16x16xf32> -> vector<16x16xf32>
    %cst_75 = arith.constant dense<0xFF800000> : vector<16xf32>
    %148 = vector.multi_reduction <maximumf>, %147, %cst_75 [1] : vector<16x16xf32> to vector<16xf32>
    %149 = vector.shape_cast %148 : vector<16xf32> to vector<16x1xf32>
    %150 = vector.broadcast %149 : vector<16x1xf32> to vector<16x16xf32>
    %151 = arith.subf %147, %150 : vector<16x16xf32>
    %152 = math.exp %151 : vector<16x16xf32>
    %cst_76 = arith.constant dense<0.000000e+00> : vector<16xf32>
    %153 = vector.multi_reduction <add>, %152, %cst_76 [1] : vector<16x16xf32> to vector<16xf32>
    %154 = vector.shape_cast %153 : vector<16xf32> to vector<16x1xf32>
    %155 = tpu.reciprocal %154 {approx = true} : vector<16x1xf32> -> vector<16x1xf32>
    %156 = arith.truncf %152 : vector<16x16xf32> to vector<16x16xbf16>
    %cst_77 = arith.constant dense<0.000000e+00> : vector<16x8xf32>
    %157 = tpu.matmul %156, %146, %cst_77 {dimension_numbers = #tpu.dot_dimension_numbers<[1], [0], [0], [1], [0, 0, 1, 1], [], []>} : vector<16x16xbf16>, vector<16x8xbf16>, vector<16x8xf32> -> vector<16x8xf32>
    %158 = vector.broadcast %155 : vector<16x1xf32> to vector<16x8xf32>
    %159 = arith.mulf %157, %158 : vector<16x8xf32>
    %160 = arith.truncf %159 : vector<16x8xf32> to vector<16x8xbf16>
    %c56_78 = arith.constant 56 : index
    %c0_79 = arith.constant 0 : index
    %161 = vector.load %arg5[%c56_78, %c0_79] : memref<64x64xbf16, #tpu.memory_space<vmem>>, vector<8x64xbf16>
    %cst_80 = arith.constant dense<0.000000e+00> : vector<16x64xf32>
    %162 = tpu.matmul %160, %161, %cst_80 {dimension_numbers = #tpu.dot_dimension_numbers<[1], [0], [0], [1], [0, 0, 1, 1], [], []>} : vector<16x8xbf16>, vector<8x64xbf16>, vector<16x64xf32> -> vector<16x64xf32>
    %163 = arith.addf %143, %162 : vector<16x64xf32>
    %c0_81 = arith.constant 0 : index
    %c0_82 = arith.constant 0 : index
    %164 = vector.load %arg6[%c0_81, %c0_82] : memref<1x64xf32, #tpu.memory_space<vmem>>, vector<1x64xf32>
    %165 = vector.broadcast %164 : vector<1x64xf32> to vector<16x64xf32>
    %166 = arith.addf %163, %165 : vector<16x64xf32>
    %c0_83 = arith.constant 0 : index
    %c0_84 = arith.constant 0 : index
    %c0_85 = arith.constant 0 : index
    %167 = vector.load %arg7[%c0_83, %c0_84, %c0_85] : memref<1x16x64xf32, #tpu.memory_space<vmem>>, vector<1x16x64xf32>
    %168 = vector.shape_cast %167 : vector<1x16x64xf32> to vector<16x64xf32>
    %169 = vector.shape_cast %166 : vector<16x64xf32> to vector<1x16x64xf32>
    tpu.vector_store %arg7[%c0_83, %c0_84, %c0_85], %169 {strides = array<i32>} : memref<1x16x64xf32, #tpu.memory_space<vmem>>, vector<1x16x64xf32>,
    return
  }
  func.func @transform_0(%arg0: i32, %arg1: i32) -> (i32, i32, i32) {
    %c0_i32 = arith.constant 0 : i32
    %c0_i32_0 = arith.constant 0 : i32
    %c0_i32_1 = arith.constant 0 : i32
    return %arg0, %c0_i32, %c0_i32_0 : i32, i32, i32
  }
  func.func @transform_1(%arg0: i32, %arg1: i32) -> (i32, i32) {
    %c0_i32 = arith.constant 0 : i32
    %c0_i32_0 = arith.constant 0 : i32
    %c0_i32_1 = arith.constant 0 : i32
    return %c0_i32, %c0_i32_0 : i32, i32
  }
  func.func @transform_2(%arg0: i32, %arg1: i32) -> (i32, i32) {
    %c0_i32 = arith.constant 0 : i32
    %c0_i32_0 = arith.constant 0 : i32
    %c0_i32_1 = arith.constant 0 : i32
    return %c0_i32, %c0_i32_0 : i32, i32
  }
  func.func @transform_3(%arg0: i32, %arg1: i32) -> (i32, i32) {
    %c0_i32 = arith.constant 0 : i32
    %c0_i32_0 = arith.constant 0 : i32
    %c0_i32_1 = arith.constant 0 : i32
    return %c0_i32, %c0_i32_0 : i32, i32
  }
  func.func @transform_4(%arg0: i32, %arg1: i32) -> (i32, i32) {
    %c0_i32 = arith.constant 0 : i32
    %c0_i32_0 = arith.constant 0 : i32
    %c0_i32_1 = arith.constant 0 : i32
    return %c0_i32, %c0_i32_0 : i32, i32
  }
  func.func @transform_5(%arg0: i32, %arg1: i32) -> (i32, i32, i32) {
    %c0_i32 = arith.constant 0 : i32
    %c0_i32_0 = arith.constant 0 : i32
    return %arg0, %arg1, %c0_i32 : i32, i32, i32
  }
}

</mosaic_0001>

<llo_original>
// kernel: tpu_custom_call.1
$region0: #{tpu_custom_call.1}
  #allocation0 [shape = 'u32[]', space=smem, size = 0x4, offset = 0x4, fixed_abs, tag = 'smem constant byte address 0x4 - core index']
  #allocation1 [shape = 'u32[144,128]{1,0:T(1,128)}', space=vmem, size = 0x12000, scoped, tag = 'internal scratch']
  #allocation2 [shape = 'bf16[16,192]{1,0:T(8,128)(2,1)}', space=vmem, size = 0x2000, scoped, tag = 'scratch operand']
  %s0 = inlined_call_operand.hbm [shape: bf16[2,16,64], index: 0, kind: input, shape index: {}]
  %s1 = inlined_call_operand.hbm [shape: bf16[64,192], index: 1, kind: input, shape index: {}]
  %s2 = inlined_call_operand.vmem [shape: f32[1,192], index: 2, kind: input, shape index: {}]
  %s3 = inlined_call_operand.hbm [shape: bf16[64,64], index: 3, kind: input, shape index: {}]
  %s4 = inlined_call_operand.vmem [shape: f32[1,64], index: 4, kind: input, shape index: {}]
  %s5 = inlined_call_operand.hbm [shape: f32[2,16,64], index: 5, kind: output, shape index: {}]
  %s6 = sld [smem:[#allocation0]]
  $region69: #{tpu_custom_call.1} parent=0
    _
  %s8 = ssub.s32 1, %s6
  %s9 = scalar_select 0, %s8, %s6
  $region1: #{tpu_custom_call.1} parent=0
    #allocation3 [shape = 'u8[8192]{0}', space=vmem, size = 0x2000, scoped, tag = 'input window, operand 0']
    #allocation4 [shape = 's32[2]{0}', space=sflag, size = 0x8, scoped, tag = 'scoped memory for tpu_custom_call.1']
    #allocation5 [shape = 's32[2]{0}', space=sflag, size = 0x8, scoped, tag = 'scoped memory for tpu_custom_call.1']
    #allocation6 [shape = 'u8[32768]{0}', space=vmem, size = 0x8000, scoped, tag = 'input window, operand 1, single buffered']
    #allocation7 [shape = 's32[1]{0}', space=sflag, size = 0x4, scoped, tag = 'scoped memory for tpu_custom_call.1']
    #allocation8 [shape = 'u8[16384]{0}', space=vmem, size = 0x4000, scoped, tag = 'input window, operand 3, single buffered']
    #allocation9 [shape = 'u8[16384]{0}', space=vmem, size = 0x4000, scoped, tag = 'output window, operand 0']
    %10 = vsyncpa [#allocation4], 0
    %s11 = scalar_lea.sflag [#allocation4], 1
    %12 = vsyncpa %s11, 0
    %13 = vsyncpa [#allocation7], 0
    %14 = vsyncpa [#allocation5], 0
    %s15 = scalar_lea.sflag [#allocation5], 1
    %16 = vsyncpa %s15, 0
    loop: start=0, step=1, limit=4
    $region2: #{tpu_custom_call.1} parent=1 // loop_pre_header
      _
    $region3: #{tpu_custom_call.1} parent=1 // loop_header
      %s18 = sphi 0, %s22
      %p19 = scmp.ge.s32.totalorder %s18, 4
      %s25 = sphi 0, %s37
      %s26 = sphi 0, %s33
      %s27 = sphi 0, %s25
      %s28 = sphi 0, %s26
      %s29 = sphi 0, %s27
      %s30 = sphi 0, %s28
      %s40 = sphi 0, %s42
      %s43 = sphi 0, %s40
      %s44 = sphi 0, %s43
      %s60 = sphi 0, %s44
      %s64 = sphi 0, %s64
      %s66 = sphi 0, %s64
      %s67 = sphi 0, %s66
      %s81 = sphi 0, %s67
      %s85 = sphi 0, %s85
      %s87 = sphi 0, %s85
      %s88 = sphi 0, %s87
      %s102 = sphi 0, %s88
      %s106 = sphi 0, %s106
      %s108 = sphi 0, %s106
      %s109 = sphi 0, %s108
      %s123 = sphi 0, %s109
      %s127 = sphi 0, %s127
      %s129 = sphi 0, %s127
      %s130 = sphi 0, %s129
      %s144 = sphi 0, %s130
      %s152 = sphi 0, %s154
      %s155 = sphi 0, %s152
      %s156 = sphi 0, %s155
      %s172 = sphi 0, %s156
    $region4: #{tpu_custom_call.1} parent=1 // loop_header_branch
      %21 = sbr.rel (%p19) target = $region8
    $region5: #{tpu_custom_call.1} parent=1 // loop_body
      %s23 = ssub.s32 %s18, 1
      %s24 = ssub.s32 %s18, 2
      %s31 = sadd.s32 1, %s26
      %p32 = scmp.ge.s32.totalorder %s31, 1
      %s33 = scalar_select %p32, 0, %s31
      %s34 = sadd.s32 1, %s25
      %s35 = scalar_select %p32, %s34, %s25
      %p36 = scmp.ge.s32.totalorder %s35, 2
      %s37 = scalar_select %p36, 0, %s35
      %s38 = ssub.s32 %s25, %s37
      %p39 = scmp.eq.s32.totalorder %s38, 0
      %s41 = sadd.s32 %s40, 1
      %s42 = scalar_select %p39, %s40, %s41
      %p45 = pneg %p39
      %p46 = scmp.eq.s32.totalorder %s18, 1
      %p47 = por %p45, %p46
      %p48 = scmp.ne.s32.totalorder %s40, %s43
      %p49 = scmp.eq.s32.totalorder %s18, 0
      %p50 = por %p48, %p49
      %p51 = scmp.ne.s32.totalorder %s40, %s43
      %p52 = scmp.eq.s32.totalorder %s23, 1
      %p53 = por %p51, %p52
      %p54 = scmp.ne.s32.totalorder %s43, %s44
      %p55 = scmp.eq.s32.totalorder %s23, 0
      %p56 = por %p54, %p55
      %p57 = scmp.ne.s32.totalorder %s43, %s44
      %p58 = scmp.eq.s32.totalorder %s24, 1
      %p59 = por %p57, %p58
      %p61 = scmp.ne.s32.totalorder %s44, %s60
      %p62 = scmp.eq.s32.totalorder %s24, 0
      %p63 = por %p61, %p62
      %s65 = sadd.s32 %s64, 1
      %p68 = scmp.eq.s32.totalorder %s18, 1
      %p69 = scmp.ne.s32.totalorder %s64, %s66
      %p70 = scmp.eq.s32.totalorder %s18, 0
      %p71 = por %p69, %p70
      %p72 = scmp.ne.s32.totalorder %s64, %s66
      %p73 = scmp.eq.s32.totalorder %s23, 1
      %p74 = por %p72, %p73
      %p75 = scmp.ne.s32.totalorder %s66, %s67
      %p76 = scmp.eq.s32.totalorder %s23, 0
      %p77 = por %p75, %p76
      %p78 = scmp.ne.s32.totalorder %s66, %s67
      %p79 = scmp.eq.s32.totalorder %s24, 1
      %p80 = por %p78, %p79
      %p82 = scmp.ne.s32.totalorder %s67, %s81
      %p83 = scmp.eq.s32.totalorder %s24, 0
      %p84 = por %p82, %p83
      %s86 = sadd.s32 %s85, 1
      %p89 = scmp.eq.s32.totalorder %s18, 1
      %p90 = scmp.ne.s32.totalorder %s85, %s87
      %p91 = scmp.eq.s32.totalorder %s18, 0
      %p92 = por %p90, %p91
      %p93 = scmp.ne.s32.totalorder %s85, %s87
      %p94 = scmp.eq.s32.totalorder %s23, 1
      %p95 = por %p93, %p94
      %p96 = scmp.ne.s32.totalorder %s87, %s88
      %p97 = scmp.eq.s32.totalorder %s23, 0
      %p98 = por %p96, %p97
      %p99 = scmp.ne.s32.totalorder %s87, %s88
      %p100 = scmp.eq.s32.totalorder %s24, 1
      %p101 = por %p99, %p100
      %p103 = scmp.ne.s32.totalorder %s88, %s102
      %p104 = scmp.eq.s32.totalorder %s24, 0
      %p105 = por %p103, %p104
      %s107 = sadd.s32 %s106, 1
      %p110 = scmp.eq.s32.totalorder %s18, 1
      %p111 = scmp.ne.s32.totalorder %s106, %s108
      %p112 = scmp.eq.s32.totalorder %s18, 0
      %p113 = por %p111, %p112
      %p114 = scmp.ne.s32.totalorder %s106, %s108
      %p115 = scmp.eq.s32.totalorder %s23, 1
      %p116 = por %p114, %p115
      %p117 = scmp.ne.s32.totalorder %s108, %s109
      %p118 = scmp.eq.s32.totalorder %s23, 0
      %p119 = por %p117, %p118
      %p120 = scmp.ne.s32.totalorder %s108, %s109
      %p121 = scmp.eq.s32.totalorder %s24, 1
      %p122 = por %p120, %p121
      %p124 = scmp.ne.s32.totalorder %s109, %s123
      %p125 = scmp.eq.s32.totalorder %s24, 0
      %p126 = por %p124, %p125
      %s128 = sadd.s32 %s127, 1
      %p131 = scmp.eq.s32.totalorder %s18, 1
      %p132 = scmp.ne.s32.totalorder %s127, %s129
      %p133 = scmp.eq.s32.totalorder %s18, 0
      %p134 = por %p132, %p133
      %p135 = scmp.ne.s32.totalorder %s127, %s129
      %p136 = scmp.eq.s32.totalorder %s23, 1
      %p137 = por %p135, %p136
      %p138 = scmp.ne.s32.totalorder %s129, %s130
      %p139 = scmp.eq.s32.totalorder %s23, 0
      %p140 = por %p138, %p139
      %p141 = scmp.ne.s32.totalorder %s129, %s130
      %p142 = scmp.eq.s32.totalorder %s24, 1
      %p143 = por %p141, %p142
      %p145 = scmp.ne.s32.totalorder %s130, %s144
      %p146 = scmp.eq.s32.totalorder %s24, 0
      %p147 = por %p145, %p146
      %s148 = ssub.s32 %s25, %s37
      %s149 = ssub.s32 %s26, %s33
      %s150 = sor.u32 %s148, %s149
      %p151 = scmp.eq.s32.totalorder %s150, 0
      %s153 = sadd.s32 %s152, 1
      %s154 = scalar_select %p151, %s152, %s153
      %p157 = pneg %p151
      %p158 = scmp.eq.s32.totalorder %s18, 1
      %p159 = por %p157, %p158
      %p160 = scmp.ne.s32.totalorder %s152, %s155
      %p161 = scmp.eq.s32.totalorder %s18, 0
      %p162 = por %p160, %p161
      %p163 = scmp.ne.s32.totalorder %s152, %s155
      %p164 = scmp.eq.s32.totalorder %s23, 1
      %p165 = por %p163, %p164
      %p166 = scmp.ne.s32.totalorder %s155, %s156
      %p167 = scmp.eq.s32.totalorder %s23, 0
      %p168 = por %p166, %p167
      %p169 = scmp.ne.s32.totalorder %s155, %s156
      %p170 = scmp.eq.s32.totalorder %s24, 1
      %p171 = por %p169, %p170
      %p173 = scmp.ne.s32.totalorder %s156, %s172
      %p174 = scmp.eq.s32.totalorder %s24, 0
      %p175 = por %p173, %p174
      %p176 = scmp.le.s32.totalorder 1, %s18
      %p177 = scmp.lt.s32.totalorder %s18, 3
      %p178 = pnand %p176, %p177
      %p179 = pneg %p178
      // Predicated region
      $region9: #{tpu_custom_call.1} parent=5 // pred_check
        _
      $region10: #{tpu_custom_call.1} parent=5 // pred_check_branch
        %181 = sbr.rel (%p178) target = $region12
      $region11: #{tpu_custom_call.1} parent=5 // pred_region
        %s182 = ssub.s32 %s18, 1
        // Predicated region
        $region13: #{tpu_custom_call.1} parent=11 // pred_check
          %p183 = pneg %p77
        $region14: #{tpu_custom_call.1} parent=11 // pred_check_branch
          %185 = sbr.rel (%p183) target = $region16
        $region15: #{tpu_custom_call.1} parent=11 // pred_region
          %s187 = ssub.s32 1024, 1024
          %188 = vsyncadd [#allocation7], %s187
          %s189 = sshll.u32 [#allocation6], 4
          %s190 = int_to_ptr.vmem [resolvable:$true] %s189
          %195 = dma.hbm_to_vmem [thread:$0]  %s1, 1024, %s190, [#allocation7], 128, 128, 8
        $region16: #{tpu_custom_call.1} parent=11 // pred_fallthru
          _
        // Predicated region
        $region17: #{tpu_custom_call.1} parent=11 // pred_check
          %p196 = pneg %p98
        $region18: #{tpu_custom_call.1} parent=11 // pred_check_branch
          %198 = sbr.rel (%p196) target = $region20
        $region19: #{tpu_custom_call.1} parent=11 // pred_region
          _
        $region20: #{tpu_custom_call.1} parent=11 // pred_fallthru
          _
        // Predicated region
        $region21: #{tpu_custom_call.1} parent=11 // pred_check
          %p199 = pneg %p119
        $region22: #{tpu_custom_call.1} parent=11 // pred_check_branch
          %201 = sbr.rel (%p199) target = $region24
        $region23: #{tpu_custom_call.1} parent=11 // pred_region
          %s203 = ssub.s32 512, 512
          %204 = vsyncadd [#allocation7], %s203
          %s205 = sshll.u32 [#allocation8], 4
          %s206 = int_to_ptr.vmem [resolvable:$true] %s205
          %211 = dma.hbm_to_vmem [thread:$0]  %s3, 512, %s206, [#allocation7], 64, 64, 4
        $region24: #{tpu_custom_call.1} parent=11 // pred_fallthru
          _
        // Predicated region
        $region25: #{tpu_custom_call.1} parent=11 // pred_check
          %p212 = pneg %p140
        $region26: #{tpu_custom_call.1} parent=11 // pred_check_branch
          %214 = sbr.rel (%p212) target = $region28
        $region27: #{tpu_custom_call.1} parent=11 // pred_region
          _
        $region28: #{tpu_custom_call.1} parent=11 // pred_fallthru
          _
      $region12: #{tpu_custom_call.1} parent=5 // pred_fallthru
        _
      %p215 = scmp.lt.s32.totalorder %s18, 2
      // Predicated region
      $region29: #{tpu_custom_call.1} parent=5 // pred_check
        %p216 = pneg %p215
      $region30: #{tpu_custom_call.1} parent=5 // pred_check_branch
        %218 = sbr.rel (%p216) target = $region32
      $region31: #{tpu_custom_call.1} parent=5 // pred_region
        // Predicated region
        $region33: #{tpu_custom_call.1} parent=31 // pred_check
          %p219 = pneg %p50
        $region34: #{tpu_custom_call.1} parent=31 // pred_check_branch
          %221 = sbr.rel (%p219) target = $region36
        $region35: #{tpu_custom_call.1} parent=31 // pred_region
          %s222 = sand.u32 %s40, 1
          %s223 = scalar_lea.sflag [#allocation4], %s222
          %s224 = sand.u32 %s40, 1
          %s225 = smul.addr %s224, 8
          %s226 = scalar_lea.vmem [#allocation3], %s225
          %s228 = ssub.s32 128, 128
          %229 = vsyncadd %s223, %s228
          %s230 = smul.addr %s25, 2
          %s231 = smul.addr %s230, 64
          %s232 = scalar_lea.hbm %s0, %s231
          %s233 = sshll.u32 %s226, 4
          %s234 = int_to_ptr.vmem [resolvable:$true] %s233
          %239 = dma.hbm_to_vmem [thread:$0]  %s232, 128, %s234, %s223, 64, 64, 4
        $region36: #{tpu_custom_call.1} parent=31 // pred_fallthru
          _
      $region32: #{tpu_custom_call.1} parent=5 // pred_fallthru
        _
      %p240 = scmp.le.s32.totalorder 1, %s18
      %p241 = scmp.lt.s32.totalorder %s18, 3
      %p242 = pnand %p240, %p241
      %p243 = pneg %p242
      // Predicated region
      $region37: #{tpu_custom_call.1} parent=5 // pred_check
        _
      $region38: #{tpu_custom_call.1} parent=5 // pred_check_branch
        %245 = sbr.rel (%p242) target = $region40
      $region39: #{tpu_custom_call.1} parent=5 // pred_region
        %s246 = ssub.s32 %s18, 1
        %s247 = sand.u32 %s43, 1
        %s248 = scalar_lea.sflag [#allocation4], %s247
        %s249 = sand.u32 %s43, 1
        %s250 = smul.addr %s249, 8
        %s251 = scalar_lea.vmem [#allocation3], %s250
        // Predicated region
        $region41: #{tpu_custom_call.1} parent=39 // pred_check
          %p252 = pneg %p56
        $region42: #{tpu_custom_call.1} parent=39 // pred_check_branch
          %254 = sbr.rel (%p252) target = $region44
        $region43: #{tpu_custom_call.1} parent=39 // pred_region
          %255 = dma.done %s248, 128
        $region44: #{tpu_custom_call.1} parent=39 // pred_fallthru
          _
        // Predicated region
        $region45: #{tpu_custom_call.1} parent=39 // pred_check
          %p256 = pneg %p77
        $region46: #{tpu_custom_call.1} parent=39 // pred_check_branch
          %258 = sbr.rel (%p256) target = $region48
        $region47: #{tpu_custom_call.1} parent=39 // pred_region
          %259 = dma.done [#allocation7], 1024
        $region48: #{tpu_custom_call.1} parent=39 // pred_fallthru
          _
        // Predicated region
        $region49: #{tpu_custom_call.1} parent=39 // pred_check
          %p260 = pneg %p119
        $region50: #{tpu_custom_call.1} parent=39 // pred_check_branch
          %262 = sbr.rel (%p260) target = $region52
        $region51: #{tpu_custom_call.1} parent=39 // pred_region
          %263 = dma.done [#allocation7], 512
        $region52: #{tpu_custom_call.1} parent=39 // pred_fallthru
          _
        %s264 = sand.u32 %s43, 1
        %s265 = scalar_lea.sflag [#allocation4], %s264
        %s266 = sand.u32 %s43, 1
        %s267 = smul.addr %s266, 8
        %s268 = scalar_lea.vmem [#allocation3], %s267
        %p269 = pneg %p56
        %p270 = pneg %p53
        %p271 = pneg %p77
        %p272 = pneg %p74
        %p273 = pneg %p98
        %p274 = pneg %p95
        %p275 = pneg %p119
        %p276 = pneg %p116
        %p277 = pneg %p140
        %p278 = pneg %p137
        %p279 = pneg %p168
        %p280 = pneg %p165
        %s281 = sand.u32 %s155, 1
        %s282 = scalar_lea.sflag [#allocation5], %s281
        %s283 = sand.u32 %s155, 1
        %s284 = smul.addr %s283, 16
        %s285 = scalar_lea.vmem [#allocation9], %s284
        %s286 = smul.u32 2, %s28
        %p288 = scmp.eq.s32.totalorder %s28, 0
        // Predicated region
        $region53: #{tpu_custom_call.1} parent=39 // pred_check
          %p289 = pneg %p288
        $region54: #{tpu_custom_call.1} parent=39 // pred_check_branch
          %291 = sbr.rel (%p289) target = $region56
        $region55: #{tpu_custom_call.1} parent=39 // pred_region
          %v292 = vld [vmem:[%s251] sm:$0xf]
          %v293 = vld [vmem:[%s251 + $0x4] sm:$0xf]
          %v294 = vld [vmem:[#allocation6] sm:$0xff]
          %v295 = vld [vmem:[#allocation6 + $0x8] sm:$0xff]
          %v296 = vld [vmem:[#allocation6 + $0x10] sm:$0xff]
          %v297 = vld [vmem:[#allocation6 + $0x18] sm:$0xff]
          %v298 = vld [vmem:[#allocation6 + $0x20] sm:$0xff]
          %v299 = vld [vmem:[#allocation6 + $0x28] sm:$0xff]
          %v300 = vld [vmem:[#allocation6 + $0x30] sm:$0xff]
          %v301 = vld [vmem:[#allocation6 + $0x38] sm:$0xff]
          %v302 = vld [vmem:[%s2] sm:$0x3]
          %v304 = vlaneseq
          %v305 = vshrl.u32 %v304, 7
          %v306 = vsub.s32 0, %v305
          %v307 = vrot.slane %v302, %v306
          %v308 = vlaneseq
          %v309 = vshrl.u32 %v308, 7
          %v310 = vsub.s32 1, %v309
          %v311 = vrot.slane %v302, %v310
          %v316 = vunpack.c.l.b16 %v292
          %v317 = vunpack.c.l.b16 %v293
          %v318 = vpack.c.b16 %v317, %v316
          %v327 = vunpack.c.l.b16 %v294
          %v328 = vunpack.c.h.b16 %v294
          %v329 = vunpack.c.l.b16 %v295
          %v330 = vunpack.c.h.b16 %v295
          %v331 = vunpack.c.l.b16 %v296
          %v332 = vunpack.c.h.b16 %v296
          %v333 = vunpack.c.l.b16 %v297
          %v334 = vunpack.c.h.b16 %v297
          %v335 = vunpack.c.l.b16 %v298
          %v336 = vunpack.c.h.b16 %v298
          %v337 = vunpack.c.l.b16 %v299
          %v338 = vunpack.c.h.b16 %v299
          %v339 = vunpack.c.l.b16 %v300
          %v340 = vunpack.c.h.b16 %v300
          %v341 = vunpack.c.l.b16 %v301
          %v342 = vunpack.c.h.b16 %v301
          %v343 = vpack.c.b16 %v329, %v327
          %v344 = vpack.c.b16 %v330, %v328
          %v345 = vpack.c.b16 %v333, %v331
          %v346 = vpack.c.b16 %v334, %v332
          %v347 = vpack.c.b16 %v337, %v335
          %v348 = vpack.c.b16 %v338, %v336
          %v349 = vpack.c.b16 %v341, %v339
          %v350 = vpack.c.b16 %v342, %v340
          %vm359 = vcmask 523264
          %v361 = vsel %vm359, %v318, 0
          %363 = vmatprep.subr.bf16.mxu0 0
          %364 = vmatpush1.bf16.msra.mxu0 0
          %365 = vmatprep.subr.bf16.mxu0 0
          %366 = vmatpush1.bf16.msra.mxu0 0
          %367 = vmatprep.subr.bf16.mxu0 0
          %368 = vmatpush1.bf16.msra.mxu0 0
          %369 = vmatprep.subr.bf16.mxu0 0
          %370 = vmatpush1.bf16.msra.mxu0 0
          %371 = vmatprep.subr.bf16.mxu0 %v350
          %372 = vmatpush1.bf16.msra.mxu0 %v349
          %373 = vmatprep.subr.bf16.mxu0 %v348
          %374 = vmatpush1.bf16.msra.mxu0 %v347
          %375 = vmatprep.subr.bf16.mxu0 %v346
          %376 = vmatpush1.bf16.msra.mxu0 %v345
          %377 = vmatprep.subr.bf16.mxu0 %v344
          %378 = vmatpush1.bf16.msra.mxu0 %v343
          %379 = vmatprep.subr.bf16.mxu0 0
          %380 = vmatpush2.bf16.msra.mxu0 0
          %381 = vmatprep.subr.bf16.mxu0 0
          %382 = vmatpush2.bf16.msra.mxu0 0
          %383 = vmatprep.subr.bf16.mxu0 0
          %384 = vmatpush2.bf16.msra.mxu0 0
          %385 = vmatprep.subr.bf16.mxu0 0
          %386 = vmatpush2.bf16.msra.mxu0 0
          %387 = vmatprep.subr.bf16.mxu0 0
          %388 = vmatpush2.bf16.msra.mxu0 0
          %389 = vmatprep.subr.bf16.mxu0 0
          %390 = vmatpush2.bf16.msra.mxu0 0
          %391 = vmatprep.subr.bf16.mxu0 0
          %392 = vmatpush2.bf16.msra.mxu0 0
          %393 = vmatprep.subr.bf16.mxu0 0
          %394 = vmatpush2.bf16.msra.mxu0 0
          %395 = vmatprep.mubr.bf16.mxu0 0
          %396 = vmatmul.mubr.bf16.gmra.mxu0 %v361
          %v397 = vpop.f32.mrf.mxu0
          %v398 = vadd.f32 %v307, %v397
          %v399 = vpop.f32.mrf.mxu0
          %v400 = vadd.f32 %v311, %v399
          %v401 = vpop.f32.mrf.mxu0
          %v402 = vadd.f32 %v307, %v401
          %v403 = vpop.f32.mrf.mxu0
          %v404 = vadd.f32 %v311, %v403
          %405 = vdwg.mxu0
          %v406 = vpack.c.bf16 %v402, %v398
          %v407 = vpack.c.bf16 %v404, %v400
          %v410 = vunpack.c.l.b16 %v406
          %v411 = vunpack.c.l.b16 %v407
          %v412 = vunpack.c.h.b16 %v406
          %v413 = vunpack.c.h.b16 %v407
          %v414 = vpack.c.b16 %v411, %v410
          %v415 = vpack.c.b16 %v413, %v412
          %vm418 = vcmask 1043456
          %vm419 = vcmask 523268
          %vm420 = vmor %vm419, %vm418
          %421 = vst.msk [vmem:[#allocation2] sm:$0xff] %vm420, %v414
          %422 = vst.msk [vmem:[#allocation2 + $0x8] sm:$0xff] %vm420, %v415
        $region56: #{tpu_custom_call.1} parent=39 // pred_fallthru
          _
        %v423 = vld [vmem:[#allocation2] sm:$0xf]
        %v424 = vld [vmem:[#allocation2 + $0x8] sm:$0xf]
        %v425 = vld [vmem:[#allocation2 + $0x4] sm:$0xf]
        %v426 = vld [vmem:[#allocation2 + $0xc] sm:$0xf]
        %v429 = vunpack.c.l.b16 %v423
        %v430 = vunpack.c.l.b16 %v424
        %v431 = vpack.c.b16 %v430, %v429
        %432 = vrot.lane.b32.xlu0 %v431, 64
        %v433 = vpop.permute.xlu0 %432
        %vm434 = vcmask 64512
        %v436 = vsel %vm434, %v431, 0
        %v439 = vsel %vm434, %v433, 0
        %441 = vmatprep.subr.bf16.mxu0 0
        %442 = vmatpush1.bf16.xpose.msra.mxu0 0
        %443 = vmatprep.subr.bf16.mxu0 0
        %444 = vmatpush1.bf16.xpose.msra.mxu0 0
        %445 = vmatprep.subr.bf16.mxu0 0
        %446 = vmatpush1.bf16.xpose.msra.mxu0 0
        %447 = vmatprep.subr.bf16.mxu0 0
        %448 = vmatpush1.bf16.xpose.msra.mxu0 0
        %449 = vmatprep.subr.bf16.mxu0 0
        %450 = vmatpush1.bf16.xpose.msra.mxu0 0
        %451 = vmatprep.subr.bf16.mxu0 0
        %452 = vmatpush1.bf16.xpose.msra.mxu0 0
        %453 = vmatprep.subr.bf16.mxu0 0
        %454 = vmatpush1.bf16.xpose.msra.mxu0 0
        %455 = vmatprep.subr.bf16.mxu0 0
        %456 = vmatpush1.bf16.xpose.msra.mxu0 %v439
        %457 = vmatprep.subr.bf16.mxu0 0
        %458 = vmatpush2.bf16.xpose.msra.mxu0 0
        %459 = vmatprep.subr.bf16.mxu0 0
        %460 = vmatpush2.bf16.xpose.msra.mxu0 0
        %461 = vmatprep.subr.bf16.mxu0 0
        %462 = vmatpush2.bf16.xpose.msra.mxu0 0
        %463 = vmatprep.subr.bf16.mxu0 0
        %464 = vmatpush2.bf16.xpose.msra.mxu0 0
        %465 = vmatprep.subr.bf16.mxu0 0
        %466 = vmatpush2.bf16.xpose.msra.mxu0 0
        %467 = vmatprep.subr.bf16.mxu0 0
        %468 = vmatpush2.bf16.xpose.msra.mxu0 0
        %469 = vmatprep.subr.bf16.mxu0 0
        %470 = vmatpush2.bf16.xpose.msra.mxu0 0
        %471 = vmatprep.subr.bf16.mxu0 0
        %472 = vmatpush2.bf16.xpose.msra.mxu0 0
        %473 = vmatprep.mubr.bf16.mxu0 0
        %474 = vmatmul.mubr.bf16.gmra.mxu0 %v436
        %v475 = vpop.f32.mrf.mxu0
        %v476 = vadd.f32 0.0, %v475
        %v477 = vpop.f32.mrf.mxu0
        %v478 = vpop.f32.mrf.mxu0
        %v479 = vadd.f32 0.0, %v478
        %v480 = vpop.f32.mrf.mxu0
        %481 = vdwg.mxu0
        %vm482 = vcmask 130048
        %v483 = vsel %vm482, %v476, -inf
        %484 = vmax.xlane.f32.xlu0 %v483
        %v485 = vpop.xlane.xlu0 %484
        %v486 = vsel %vm482, %v479, -inf
        %487 = vmax.xlane.f32.xlu0 %v486
        %v488 = vpop.xlane.xlu0 %487
        %v489 = vsub.f32 %v476, %v485
        %v490 = vsub.f32 %v479, %v488
        %v491 = vmul.f32 %v489, 1.442695
        %v492 = vpow.pop %v491
        %v493 = vmul.f32 %v490, 1.442695
        %v494 = vpow.pop %v493
        %v495 = vsel %vm482, %v492, 0.0
        %496 = vadd.xlane.f32.xlu0 %v495
        %v497 = vpop.xlane.xlu0 %496
        %v498 = vsel %vm482, %v494, 0.0
        %499 = vadd.xlane.f32.xlu0 %v498
        %v500 = vpop.xlane.xlu0 %499
        %v501 = vrcp.pop %v497
        %v502 = vrcp.pop %v500
        %v503 = vpack.c.bf16 %v494, %v492
        %v506 = vunpack.c.l.b16 %v425
        %v507 = vunpack.c.l.b16 %v426
        %v508 = vpack.c.b16 %v507, %v506
        %v511 = vsel %vm482, %v503, 0
        %513 = vmatprep.subr.bf16.mxu0 0
        %514 = vmatpush1.bf16.msra.mxu0 0
        %515 = vmatprep.subr.bf16.mxu0 0
        %516 = vmatpush1.bf16.msra.mxu0 0
        %517 = vmatprep.subr.bf16.mxu0 0
        %518 = vmatpush1.bf16.msra.mxu0 0
        %519 = vmatprep.subr.bf16.mxu0 0
        %520 = vmatpush1.bf16.msra.mxu0 0
        %521 = vmatprep.subr.bf16.mxu0 0
        %522 = vmatpush1.bf16.msra.mxu0 0
        %523 = vmatprep.subr.bf16.mxu0 0
        %524 = vmatpush1.bf16.msra.mxu0 0
        %525 = vmatprep.subr.bf16.mxu0 0
        %526 = vmatpush1.bf16.msra.mxu0 0
        %527 = vmatprep.subr.bf16.mxu0 0
        %528 = vmatpush1.bf16.msra.mxu0 %v508
        %529 = vmatprep.subr.bf16.mxu0 0
        %530 = vmatpush2.bf16.msra.mxu0 0
        %531 = vmatprep.subr.bf16.mxu0 0
        %532 = vmatpush2.bf16.msra.mxu0 0
        %533 = vmatprep.subr.bf16.mxu0 0
        %534 = vmatpush2.bf16.msra.mxu0 0
        %535 = vmatprep.subr.bf16.mxu0 0
        %536 = vmatpush2.bf16.msra.mxu0 0
        %537 = vmatprep.subr.bf16.mxu0 0
        %538 = vmatpush2.bf16.msra.mxu0 0
        %539 = vmatprep.subr.bf16.mxu0 0
        %540 = vmatpush2.bf16.msra.mxu0 0
        %541 = vmatprep.subr.bf16.mxu0 0
        %542 = vmatpush2.bf16.msra.mxu0 0
        %543 = vmatprep.subr.bf16.mxu0 0
        %544 = vmatpush2.bf16.msra.mxu0 0
        %545 = vmatprep.mubr.bf16.mxu0 0
        %546 = vmatmul.mubr.bf16.gmra.mxu0 %v511
        %v547 = vpop.f32.mrf.mxu0
        %v548 = vadd.f32 0.0, %v547
        %v549 = vpop.f32.mrf.mxu0
        %v550 = vpop.f32.mrf.mxu0
        %v551 = vadd.f32 0.0, %v550
        %v552 = vpop.f32.mrf.mxu0
        %553 = vdwg.mxu0
        %v554 = vmul.f32 %v548, %v501
        %v555 = vmul.f32 %v551, %v502
        %v556 = vpack.c.bf16 %v555, %v554
        %v557 = vld [vmem:[#allocation8] sm:$0xf]
        %558 = vrot.lane.b32.xlu0 %v431, 120
        %v559 = vpop.permute.xlu0 %558
        %560 = vrot.lane.b32.xlu0 %v431, 56
        %v561 = vpop.permute.xlu0 %560
        %v563 = vsel %vm434, %v559, 0
        %v566 = vsel %vm434, %v561, 0
        %568 = vmatprep.subr.bf16.mxu0 0
        %569 = vmatpush1.bf16.xpose.msra.mxu0 0
        %570 = vmatprep.subr.bf16.mxu0 0
        %571 = vmatpush1.bf16.xpose.msra.mxu0 0
        %572 = vmatprep.subr.bf16.mxu0 0
        %573 = vmatpush1.bf16.xpose.msra.mxu0 0
        %574 = vmatprep.subr.bf16.mxu0 0
        %575 = vmatpush1.bf16.xpose.msra.mxu0 0
        %576 = vmatprep.subr.bf16.mxu0 0
        %577 = vmatpush1.bf16.xpose.msra.mxu0 0
        %578 = vmatprep.subr.bf16.mxu0 0
        %579 = vmatpush1.bf16.xpose.msra.mxu0 0
        %580 = vmatprep.subr.bf16.mxu0 0
        %581 = vmatpush1.bf16.xpose.msra.mxu0 0
        %582 = vmatprep.subr.bf16.mxu0 0
        %583 = vmatpush1.bf16.xpose.msra.mxu0 %v566
        %584 = vmatprep.subr.bf16.mxu0 0
        %585 = vmatpush2.bf16.xpose.msra.mxu0 0
        %586 = vmatprep.subr.bf16.mxu0 0
        %587 = vmatpush2.bf16.xpose.msra.mxu0 0
        %588 = vmatprep.subr.bf16.mxu0 0
        %589 = vmatpush2.bf16.xpose.msra.mxu0 0
        %590 = vmatprep.subr.bf16.mxu0 0
        %591 = vmatpush2.bf16.xpose.msra.mxu0 0
        %592 = vmatprep.subr.bf16.mxu0 0
        %593 = vmatpush2.bf16.xpose.msra.mxu0 0
        %594 = vmatprep.subr.bf16.mxu0 0
        %595 = vmatpush2.bf16.xpose.msra.mxu0 0
        %596 = vmatprep.subr.bf16.mxu0 0
        %597 = vmatpush2.bf16.xpose.msra.mxu0 0
        %598 = vmatprep.subr.bf16.mxu0 0
        %599 = vmatpush2.bf16.xpose.msra.mxu0 0
        %600 = vmatprep.mubr.bf16.mxu0 0
        %601 = vmatmul.mubr.bf16.gmra.mxu0 %v563
        %v602 = vpop.f32.mrf.mxu0
        %v603 = vadd.f32 0.0, %v602
        %v604 = vpop.f32.mrf.mxu0
        %v605 = vpop.f32.mrf.mxu0
        %v606 = vadd.f32 0.0, %v605
        %v607 = vpop.f32.mrf.mxu0
        %608 = vdwg.mxu0
        %v609 = vsel %vm482, %v603, -inf
        %610 = vmax.xlane.f32.xlu0 %v609
        %v611 = vpop.xlane.xlu0 %610
        %v612 = vsel %vm482, %v606, -inf
        %613 = vmax.xlane.f32.xlu0 %v612
        %v614 = vpop.xlane.xlu0 %613
        %v615 = vsub.f32 %v603, %v611
        %v616 = vsub.f32 %v606, %v614
        %v617 = vmul.f32 %v615, 1.442695
        %v618 = vpow.pop %v617
        %v619 = vmul.f32 %v616, 1.442695
        %v620 = vpow.pop %v619
        %v621 = vsel %vm482, %v618, 0.0
        %622 = vadd.xlane.f32.xlu0 %v621
        %v623 = vpop.xlane.xlu0 %622
        %v624 = vsel %vm482, %v620, 0.0
        %625 = vadd.xlane.f32.xlu0 %v624
        %v626 = vpop.xlane.xlu0 %625
        %v627 = vrcp.pop %v623
        %v628 = vrcp.pop %v626
        %v629 = vpack.c.bf16 %v620, %v618
        %630 = vrot.lane.b32.xlu0 %v508, 120
        %v631 = vpop.permute.xlu0 %630
        %v634 = vsel %vm482, %v629, 0
        %636 = vmatprep.subr.bf16.mxu0 0
        %637 = vmatpush1.bf16.msra.mxu0 0
        %638 = vmatprep.subr.bf16.mxu0 0
        %639 = vmatpush1.bf16.msra.mxu0 0
        %640 = vmatprep.subr.bf16.mxu0 0
        %641 = vmatpush1.bf16.msra.mxu0 0
        %642 = vmatprep.subr.bf16.mxu0 0
        %643 = vmatpush1.bf16.msra.mxu0 0
        %644 = vmatprep.subr.bf16.mxu0 0
        %645 = vmatpush1.bf16.msra.mxu0 0
        %646 = vmatprep.subr.bf16.mxu0 0
        %647 = vmatpush1.bf16.msra.mxu0 0
        %648 = vmatprep.subr.bf16.mxu0 0
        %649 = vmatpush1.bf16.msra.mxu0 0
        %650 = vmatprep.subr.bf16.mxu0 0
        %651 = vmatpush1.bf16.msra.mxu0 %v631
        %652 = vmatprep.subr.bf16.mxu0 0
        %653 = vmatpush2.bf16.msra.mxu0 0
        %654 = vmatprep.subr.bf16.mxu0 0
        %655 = vmatpush2.bf16.msra.mxu0 0
        %656 = vmatprep.subr.bf16.mxu0 0
        %657 = vmatpush2.bf16.msra.mxu0 0
        %658 = vmatprep.subr.bf16.mxu0 0
        %659 = vmatpush2.bf16.msra.mxu0 0
        %660 = vmatprep.subr.bf16.mxu0 0
        %661 = vmatpush2.bf16.msra.mxu0 0
        %662 = vmatprep.subr.bf16.mxu0 0
        %663 = vmatpush2.bf16.msra.mxu0 0
        %664 = vmatprep.subr.bf16.mxu0 0
        %665 = vmatpush2.bf16.msra.mxu0 0
        %666 = vmatprep.subr.bf16.mxu0 0
        %667 = vmatpush2.bf16.msra.mxu0 0
        %668 = vmatprep.mubr.bf16.mxu0 0
        %669 = vmatmul.mubr.bf16.gmra.mxu0 %v634
        %v670 = vpop.f32.mrf.mxu0
        %v671 = vadd.f32 0.0, %v670
        %v672 = vpop.f32.mrf.mxu0
        %v673 = vpop.f32.mrf.mxu0
        %v674 = vadd.f32 0.0, %v673
        %v675 = vpop.f32.mrf.mxu0
        %676 = vdwg.mxu0
        %v677 = vmul.f32 %v671, %v627
        %v678 = vmul.f32 %v674, %v628
        %v679 = vpack.c.bf16 %v678, %v677
        %v680 = vld [vmem:[#allocation8 + $0x4] sm:$0xf]
        %v682 = vsel %vm434, %v679, 0
        %vm684 = vcmask 1043456
        %v686 = vsel %vm684, %v680, 0
        %688 = vmatprep.subr.bf16.mxu0 0
        %689 = vmatpush1.bf16.msra.mxu0 0
        %690 = vmatprep.subr.bf16.mxu0 0
        %691 = vmatpush1.bf16.msra.mxu0 0
        %692 = vmatprep.subr.bf16.mxu0 0
        %693 = vmatpush1.bf16.msra.mxu0 0
        %694 = vmatprep.subr.bf16.mxu0 0
        %695 = vmatpush1.bf16.msra.mxu0 0
        %696 = vmatprep.subr.bf16.mxu0 0
        %697 = vmatpush1.bf16.msra.mxu0 0
        %698 = vmatprep.subr.bf16.mxu0 0
        %699 = vmatpush1.bf16.msra.mxu0 0
        %700 = vmatprep.subr.bf16.mxu0 0
        %701 = vmatpush1.bf16.msra.mxu0 0
        %702 = vmatprep.subr.bf16.mxu0 0
        %703 = vmatpush1.bf16.msra.mxu0 %v686
        %704 = vmatprep.subr.bf16.mxu0 0
        %705 = vmatpush2.bf16.msra.mxu0 0
        %706 = vmatprep.subr.bf16.mxu0 0
        %707 = vmatpush2.bf16.msra.mxu0 0
        %708 = vmatprep.subr.bf16.mxu0 0
        %709 = vmatpush2.bf16.msra.mxu0 0
        %710 = vmatprep.subr.bf16.mxu0 0
        %711 = vmatpush2.bf16.msra.mxu0 0
        %712 = vmatprep.subr.bf16.mxu0 0
        %713 = vmatpush2.bf16.msra.mxu0 0
        %714 = vmatprep.subr.bf16.mxu0 0
        %715 = vmatpush2.bf16.msra.mxu0 0
        %716 = vmatprep.subr.bf16.mxu0 0
        %717 = vmatpush2.bf16.msra.mxu0 0
        %718 = vmatprep.subr.bf16.mxu0 0
        %719 = vmatpush2.bf16.msra.mxu0 0
        %720 = vmatprep.mubr.bf16.mxu0 0
        %721 = vmatmul.mubr.bf16.gmra.mxu0 %v682
        %v722 = vpop.f32.mrf.mxu0
        %v723 = vadd.f32 0.0, %v722
        %v724 = vpop.f32.mrf.mxu0
        %v725 = vpop.f32.mrf.mxu0
        %v726 = vadd.f32 0.0, %v725
        %v727 = vpop.f32.mrf.mxu0
        %728 = vdwg.mxu0
        %v730 = vsel %vm434, %v556, 0
        %v733 = vsel %vm684, %v557, 0
        %735 = vmatprep.subr.bf16.mxu0 0
        %736 = vmatpush1.bf16.msra.mxu0 0
        %737 = vmatprep.subr.bf16.mxu0 0
        %738 = vmatpush1.bf16.msra.mxu0 0
        %739 = vmatprep.subr.bf16.mxu0 0
        %740 = vmatpush1.bf16.msra.mxu0 0
        %741 = vmatprep.subr.bf16.mxu0 0
        %742 = vmatpush1.bf16.msra.mxu0 0
        %743 = vmatprep.subr.bf16.mxu0 0
        %744 = vmatpush1.bf16.msra.mxu0 0
        %745 = vmatprep.subr.bf16.mxu0 0
        %746 = vmatpush1.bf16.msra.mxu0 0
        %747 = vmatprep.subr.bf16.mxu0 0
        %748 = vmatpush1.bf16.msra.mxu0 0
        %749 = vmatprep.subr.bf16.mxu0 0
        %750 = vmatpush1.bf16.msra.mxu0 %v733
        %751 = vmatprep.subr.bf16.mxu0 0
        %752 = vmatpush2.bf16.msra.mxu0 0
        %753 = vmatprep.subr.bf16.mxu0 0
        %754 = vmatpush2.bf16.msra.mxu0 0
        %755 = vmatprep.subr.bf16.mxu0 0
        %756 = vmatpush2.bf16.msra.mxu0 0
        %757 = vmatprep.subr.bf16.mxu0 0
        %758 = vmatpush2.bf16.msra.mxu0 0
        %759 = vmatprep.subr.bf16.mxu0 0
        %760 = vmatpush2.bf16.msra.mxu0 0
        %761 = vmatprep.subr.bf16.mxu0 0
        %762 = vmatpush2.bf16.msra.mxu0 0
        %763 = vmatprep.subr.bf16.mxu0 0
        %764 = vmatpush2.bf16.msra.mxu0 0
        %765 = vmatprep.subr.bf16.mxu0 0
        %766 = vmatpush2.bf16.msra.mxu0 0
        %767 = vmatprep.mubr.bf16.mxu0 0
        %768 = vmatmul.mubr.bf16.gmra.mxu0 %v730
        %v769 = vpop.f32.mrf.mxu0
        %v770 = vadd.f32 %v723, %v769
        %v771 = vpop.f32.mrf.mxu0
        %v772 = vpop.f32.mrf.mxu0
        %v773 = vadd.f32 %v726, %v772
        %v774 = vpop.f32.mrf.mxu0
        %775 = vdwg.mxu0
        %776 = vrot.lane.b32.xlu0 %v431, 112
        %v777 = vpop.permute.xlu0 %776
        %778 = vrot.lane.b32.xlu0 %v431, 48
        %v779 = vpop.permute.xlu0 %778
        %v781 = vsel %vm434, %v777, 0
        %v784 = vsel %vm434, %v779, 0
        %786 = vmatprep.subr.bf16.mxu0 0
        %787 = vmatpush1.bf16.xpose.msra.mxu0 0
        %788 = vmatprep.subr.bf16.mxu0 0
        %789 = vmatpush1.bf16.xpose.msra.mxu0 0
        %790 = vmatprep.subr.bf16.mxu0 0
        %791 = vmatpush1.bf16.xpose.msra.mxu0 0
        %792 = vmatprep.subr.bf16.mxu0 0
        %793 = vmatpush1.bf16.xpose.msra.mxu0 0
        %794 = vmatprep.subr.bf16.mxu0 0
        %795 = vmatpush1.bf16.xpose.msra.mxu0 0
        %796 = vmatprep.subr.bf16.mxu0 0
        %797 = vmatpush1.bf16.xpose.msra.mxu0 0
        %798 = vmatprep.subr.bf16.mxu0 0
        %799 = vmatpush1.bf16.xpose.msra.mxu0 0
        %800 = vmatprep.subr.bf16.mxu0 0
        %801 = vmatpush1.bf16.xpose.msra.mxu0 %v784
        %802 = vmatprep.subr.bf16.mxu0 0
        %803 = vmatpush2.bf16.xpose.msra.mxu0 0
        %804 = vmatprep.subr.bf16.mxu0 0
        %805 = vmatpush2.bf16.xpose.msra.mxu0 0
        %806 = vmatprep.subr.bf16.mxu0 0
        %807 = vmatpush2.bf16.xpose.msra.mxu0 0
        %808 = vmatprep.subr.bf16.mxu0 0
        %809 = vmatpush2.bf16.xpose.msra.mxu0 0
        %810 = vmatprep.subr.bf16.mxu0 0
        %811 = vmatpush2.bf16.xpose.msra.mxu0 0
        %812 = vmatprep.subr.bf16.mxu0 0
        %813 = vmatpush2.bf16.xpose.msra.mxu0 0
        %814 = vmatprep.subr.bf16.mxu0 0
        %815 = vmatpush2.bf16.xpose.msra.mxu0 0
        %816 = vmatprep.subr.bf16.mxu0 0
        %817 = vmatpush2.bf16.xpose.msra.mxu0 0
        %818 = vmatprep.mubr.bf16.mxu0 0
        %819 = vmatmul.mubr.bf16.gmra.mxu0 %v781
        %v820 = vpop.f32.mrf.mxu0
        %v821 = vadd.f32 0.0, %v820
        %v822 = vpop.f32.mrf.mxu0
        %v823 = vpop.f32.mrf.mxu0
        %v824 = vadd.f32 0.0, %v823
        %v825 = vpop.f32.mrf.mxu0
        %826 = vdwg.mxu0
        %v827 = vsel %vm482, %v821, -inf
        %828 = vmax.xlane.f32.xlu0 %v827
        %v829 = vpop.xlane.xlu0 %828
        %v830 = vsel %vm482, %v824, -inf
        %831 = vmax.xlane.f32.xlu0 %v830
        %v832 = vpop.xlane.xlu0 %831
        %v833 = vsub.f32 %v821, %v829
        %v834 = vsub.f32 %v824, %v832
        %v835 = vmul.f32 %v833, 1.442695
        %v836 = vpow.pop %v835
        %v837 = vmul.f32 %v834, 1.442695
        %v838 = vpow.pop %v837
        %v839 = vsel %vm482, %v836, 0.0
        %840 = vadd.xlane.f32.xlu0 %v839
        %v841 = vpop.xlane.xlu0 %840
        %v842 = vsel %vm482, %v838, 0.0
        %843 = vadd.xlane.f32.xlu0 %v842
        %v844 = vpop.xlane.xlu0 %843
        %v845 = vrcp.pop %v841
        %v846 = vrcp.pop %v844
        %v847 = vpack.c.bf16 %v838, %v836
        %848 = vrot.lane.b32.xlu0 %v508, 112
        %v849 = vpop.permute.xlu0 %848
        %v852 = vsel %vm482, %v847, 0
        %854 = vmatprep.subr.bf16.mxu0 0
        %855 = vmatpush1.bf16.msra.mxu0 0
        %856 = vmatprep.subr.bf16.mxu0 0
        %857 = vmatpush1.bf16.msra.mxu0 0
        %858 = vmatprep.subr.bf16.mxu0 0
        %859 = vmatpush1.bf16.msra.mxu0 0
        %860 = vmatprep.subr.bf16.mxu0 0
        %861 = vmatpush1.bf16.msra.mxu0 0
        %862 = vmatprep.subr.bf16.mxu0 0
        %863 = vmatpush1.bf16.msra.mxu0 0
        %864 = vmatprep.subr.bf16.mxu0 0
        %865 = vmatpush1.bf16.msra.mxu0 0
        %866 = vmatprep.subr.bf16.mxu0 0
        %867 = vmatpush1.bf16.msra.mxu0 0
        %868 = vmatprep.subr.bf16.mxu0 0
        %869 = vmatpush1.bf16.msra.mxu0 %v849
        %870 = vmatprep.subr.bf16.mxu0 0
        %871 = vmatpush2.bf16.msra.mxu0 0
        %872 = vmatprep.subr.bf16.mxu0 0
        %873 = vmatpush2.bf16.msra.mxu0 0
        %874 = vmatprep.subr.bf16.mxu0 0
        %875 = vmatpush2.bf16.msra.mxu0 0
        %876 = vmatprep.subr.bf16.mxu0 0
        %877 = vmatpush2.bf16.msra.mxu0 0
        %878 = vmatprep.subr.bf16.mxu0 0
        %879 = vmatpush2.bf16.msra.mxu0 0
        %880 = vmatprep.subr.bf16.mxu0 0
        %881 = vmatpush2.bf16.msra.mxu0 0
        %882 = vmatprep.subr.bf16.mxu0 0
        %883 = vmatpush2.bf16.msra.mxu0 0
        %884 = vmatprep.subr.bf16.mxu0 0
        %885 = vmatpush2.bf16.msra.mxu0 0
        %886 = vmatprep.mubr.bf16.mxu0 0
        %887 = vmatmul.mubr.bf16.gmra.mxu0 %v852
        %v888 = vpop.f32.mrf.mxu0
        %v889 = vadd.f32 0.0, %v888
        %v890 = vpop.f32.mrf.mxu0
        %v891 = vpop.f32.mrf.mxu0
        %v892 = vadd.f32 0.0, %v891
        %v893 = vpop.f32.mrf.mxu0
        %894 = vdwg.mxu0
        %v895 = vmul.f32 %v889, %v845
        %v896 = vmul.f32 %v892, %v846
        %v897 = vpack.c.bf16 %v896, %v895
        %v898 = vld [vmem:[#allocation8 + $0x8] sm:$0xf]
        %v900 = vsel %vm434, %v897, 0
        %v903 = vsel %vm684, %v898, 0
        %905 = vmatprep.subr.bf16.mxu0 0
        %906 = vmatpush1.bf16.msra.mxu0 0
        %907 = vmatprep.subr.bf16.mxu0 0
        %908 = vmatpush1.bf16.msra.mxu0 0
        %909 = vmatprep.subr.bf16.mxu0 0
        %910 = vmatpush1.bf16.msra.mxu0 0
        %911 = vmatprep.subr.bf16.mxu0 0
        %912 = vmatpush1.bf16.msra.mxu0 0
        %913 = vmatprep.subr.bf16.mxu0 0
        %914 = vmatpush1.bf16.msra.mxu0 0
        %915 = vmatprep.subr.bf16.mxu0 0
        %916 = vmatpush1.bf16.msra.mxu0 0
        %917 = vmatprep.subr.bf16.mxu0 0
        %918 = vmatpush1.bf16.msra.mxu0 0
        %919 = vmatprep.subr.bf16.mxu0 0
        %920 = vmatpush1.bf16.msra.mxu0 %v903
        %921 = vmatprep.subr.bf16.mxu0 0
        %922 = vmatpush2.bf16.msra.mxu0 0
        %923 = vmatprep.subr.bf16.mxu0 0
        %924 = vmatpush2.bf16.msra.mxu0 0
        %925 = vmatprep.subr.bf16.mxu0 0
        %926 = vmatpush2.bf16.msra.mxu0 0
        %927 = vmatprep.subr.bf16.mxu0 0
        %928 = vmatpush2.bf16.msra.mxu0 0
        %929 = vmatprep.subr.bf16.mxu0 0
        %930 = vmatpush2.bf16.msra.mxu0 0
        %931 = vmatprep.subr.bf16.mxu0 0
        %932 = vmatpush2.bf16.msra.mxu0 0
        %933 = vmatprep.subr.bf16.mxu0 0
        %934 = vmatpush2.bf16.msra.mxu0 0
        %935 = vmatprep.subr.bf16.mxu0 0
        %936 = vmatpush2.bf16.msra.mxu0 0
        %937 = vmatprep.mubr.bf16.mxu0 0
        %938 = vmatmul.mubr.bf16.gmra.mxu0 %v900
        %v939 = vpop.f32.mrf.mxu0
        %v940 = vadd.f32 0.0, %v939
        %v941 = vpop.f32.mrf.mxu0
        %v942 = vpop.f32.mrf.mxu0
        %v943 = vadd.f32 0.0, %v942
        %v944 = vpop.f32.mrf.mxu0
        %945 = vdwg.mxu0
        %v946 = vadd.f32 %v770, %v940
        %v947 = vadd.f32 %v773, %v943
        %948 = vrot.lane.b32.xlu0 %v431, 104
        %v949 = vpop.permute.xlu0 %948
        %950 = vrot.lane.b32.xlu0 %v431, 40
        %v951 = vpop.permute.xlu0 %950
        %v953 = vsel %vm434, %v949, 0
        %v956 = vsel %vm434, %v951, 0
        %958 = vmatprep.subr.bf16.mxu0 0
        %959 = vmatpush1.bf16.xpose.msra.mxu0 0
        %960 = vmatprep.subr.bf16.mxu0 0
        %961 = vmatpush1.bf16.xpose.msra.mxu0 0
        %962 = vmatprep.subr.bf16.mxu0 0
        %963 = vmatpush1.bf16.xpose.msra.mxu0 0
        %964 = vmatprep.subr.bf16.mxu0 0
        %965 = vmatpush1.bf16.xpose.msra.mxu0 0
        %966 = vmatprep.subr.bf16.mxu0 0
        %967 = vmatpush1.bf16.xpose.msra.mxu0 0
        %968 = vmatprep.subr.bf16.mxu0 0
        %969 = vmatpush1.bf16.xpose.msra.mxu0 0
        %970 = vmatprep.subr.bf16.mxu0 0
        %971 = vmatpush1.bf16.xpose.msra.mxu0 0
        %972 = vmatprep.subr.bf16.mxu0 0
        %973 = vmatpush1.bf16.xpose.msra.mxu0 %v956
        %974 = vmatprep.subr.bf16.mxu0 0
        %975 = vmatpush2.bf16.xpose.msra.mxu0 0
        %976 = vmatprep.subr.bf16.mxu0 0
        %977 = vmatpush2.bf16.xpose.msra.mxu0 0
        %978 = vmatprep.subr.bf16.mxu0 0
        %979 = vmatpush2.bf16.xpose.msra.mxu0 0
        %980 = vmatprep.subr.bf16.mxu0 0
        %981 = vmatpush2.bf16.xpose.msra.mxu0 0
        %982 = vmatprep.subr.bf16.mxu0 0
        %983 = vmatpush2.bf16.xpose.msra.mxu0 0
        %984 = vmatprep.subr.bf16.mxu0 0
        %985 = vmatpush2.bf16.xpose.msra.mxu0 0
        %986 = vmatprep.subr.bf16.mxu0 0
        %987 = vmatpush2.bf16.xpose.msra.mxu0 0
        %988 = vmatprep.subr.bf16.mxu0 0
        %989 = vmatpush2.bf16.xpose.msra.mxu0 0
        %990 = vmatprep.mubr.bf16.mxu0 0
        %991 = vmatmul.mubr.bf16.gmra.mxu0 %v953
        %v992 = vpop.f32.mrf.mxu0
        %v993 = vadd.f32 0.0, %v992
        %v994 = vpop.f32.mrf.mxu0
        %v995 = vpop.f32.mrf.mxu0
        %v996 = vadd.f32 0.0, %v995
        %v997 = vpop.f32.mrf.mxu0
        %998 = vdwg.mxu0
        %v999 = vsel %vm482, %v993, -inf
        %1000 = vmax.xlane.f32.xlu0 %v999
        %v1001 = vpop.xlane.xlu0 %1000
        %v1002 = vsel %vm482, %v996, -inf
        %1003 = vmax.xlane.f32.xlu0 %v1002
        %v1004 = vpop.xlane.xlu0 %1003
        %v1005 = vsub.f32 %v993, %v1001
        %v1006 = vsub.f32 %v996, %v1004
        %v1007 = vmul.f32 %v1005, 1.442695
        %v1008 = vpow.pop %v1007
        %v1009 = vmul.f32 %v1006, 1.442695
        %v1010 = vpow.pop %v1009
        %v1011 = vsel %vm482, %v1008, 0.0
        %1012 = vadd.xlane.f32.xlu0 %v1011
        %v1013 = vpop.xlane.xlu0 %1012
        %v1014 = vsel %vm482, %v1010, 0.0
        %1015 = vadd.xlane.f32.xlu0 %v1014
        %v1016 = vpop.xlane.xlu0 %1015
        %v1017 = vrcp.pop %v1013
        %v1018 = vrcp.pop %v1016
        %v1019 = vpack.c.bf16 %v1010, %v1008
        %1020 = vrot.lane.b32.xlu0 %v508, 104
        %v1021 = vpop.permute.xlu0 %1020
        %v1024 = vsel %vm482, %v1019, 0
        %1026 = vmatprep.subr.bf16.mxu0 0
        %1027 = vmatpush1.bf16.msra.mxu0 0
        %1028 = vmatprep.subr.bf16.mxu0 0
        %1029 = vmatpush1.bf16.msra.mxu0 0
        %1030 = vmatprep.subr.bf16.mxu0 0
        %1031 = vmatpush1.bf16.msra.mxu0 0
        %1032 = vmatprep.subr.bf16.mxu0 0
        %1033 = vmatpush1.bf16.msra.mxu0 0
        %1034 = vmatprep.subr.bf16.mxu0 0
        %1035 = vmatpush1.bf16.msra.mxu0 0
        %1036 = vmatprep.subr.bf16.mxu0 0
        %1037 = vmatpush1.bf16.msra.mxu0 0
        %1038 = vmatprep.subr.bf16.mxu0 0
        %1039 = vmatpush1.bf16.msra.mxu0 0
        %1040 = vmatprep.subr.bf16.mxu0 0
        %1041 = vmatpush1.bf16.msra.mxu0 %v1021
        %1042 = vmatprep.subr.bf16.mxu0 0
        %1043 = vmatpush2.bf16.msra.mxu0 0
        %1044 = vmatprep.subr.bf16.mxu0 0
        %1045 = vmatpush2.bf16.msra.mxu0 0
        %1046 = vmatprep.subr.bf16.mxu0 0
        %1047 = vmatpush2.bf16.msra.mxu0 0
        %1048 = vmatprep.subr.bf16.mxu0 0
        %1049 = vmatpush2.bf16.msra.mxu0 0
        %1050 = vmatprep.subr.bf16.mxu0 0
        %1051 = vmatpush2.bf16.msra.mxu0 0
        %1052 = vmatprep.subr.bf16.mxu0 0
        %1053 = vmatpush2.bf16.msra.mxu0 0
        %1054 = vmatprep.subr.bf16.mxu0 0
        %1055 = vmatpush2.bf16.msra.mxu0 0
        %1056 = vmatprep.subr.bf16.mxu0 0
        %1057 = vmatpush2.bf16.msra.mxu0 0
        %1058 = vmatprep.mubr.bf16.mxu0 0
        %1059 = vmatmul.mubr.bf16.gmra.mxu0 %v1024
        %v1060 = vpop.f32.mrf.mxu0
        %v1061 = vadd.f32 0.0, %v1060
        %v1062 = vpop.f32.mrf.mxu0
        %v1063 = vpop.f32.mrf.mxu0
        %v1064 = vadd.f32 0.0, %v1063
        %v1065 = vpop.f32.mrf.mxu0
        %1066 = vdwg.mxu0
        %v1067 = vmul.f32 %v1061, %v1017
        %v1068 = vmul.f32 %v1064, %v1018
        %v1069 = vpack.c.bf16 %v1068, %v1067
        %v1070 = vld [vmem:[#allocation8 + $0xc] sm:$0xf]
        %v1072 = vsel %vm434, %v1069, 0
        %v1075 = vsel %vm684, %v1070, 0
        %1077 = vmatprep.subr.bf16.mxu0 0
        %1078 = vmatpush1.bf16.msra.mxu0 0
        %1079 = vmatprep.subr.bf16.mxu0 0
        %1080 = vmatpush1.bf16.msra.mxu0 0
        %1081 = vmatprep.subr.bf16.mxu0 0
        %1082 = vmatpush1.bf16.msra.mxu0 0
        %1083 = vmatprep.subr.bf16.mxu0 0
        %1084 = vmatpush1.bf16.msra.mxu0 0
        %1085 = vmatprep.subr.bf16.mxu0 0
        %1086 = vmatpush1.bf16.msra.mxu0 0
        %1087 = vmatprep.subr.bf16.mxu0 0
        %1088 = vmatpush1.bf16.msra.mxu0 0
        %1089 = vmatprep.subr.bf16.mxu0 0
        %1090 = vmatpush1.bf16.msra.mxu0 0
        %1091 = vmatprep.subr.bf16.mxu0 0
        %1092 = vmatpush1.bf16.msra.mxu0 %v1075
        %1093 = vmatprep.subr.bf16.mxu0 0
        %1094 = vmatpush2.bf16.msra.mxu0 0
        %1095 = vmatprep.subr.bf16.mxu0 0
        %1096 = vmatpush2.bf16.msra.mxu0 0
        %1097 = vmatprep.subr.bf16.mxu0 0
        %1098 = vmatpush2.bf16.msra.mxu0 0
        %1099 = vmatprep.subr.bf16.mxu0 0
        %1100 = vmatpush2.bf16.msra.mxu0 0
        %1101 = vmatprep.subr.bf16.mxu0 0
        %1102 = vmatpush2.bf16.msra.mxu0 0
        %1103 = vmatprep.subr.bf16.mxu0 0
        %1104 = vmatpush2.bf16.msra.mxu0 0
        %1105 = vmatprep.subr.bf16.mxu0 0
        %1106 = vmatpush2.bf16.msra.mxu0 0
        %1107 = vmatprep.subr.bf16.mxu0 0
        %1108 = vmatpush2.bf16.msra.mxu0 0
        %1109 = vmatprep.mubr.bf16.mxu0 0
        %1110 = vmatmul.mubr.bf16.gmra.mxu0 %v1072
        %v1111 = vpop.f32.mrf.mxu0
        %v1112 = vadd.f32 0.0, %v1111
        %v1113 = vpop.f32.mrf.mxu0
        %v1114 = vpop.f32.mrf.mxu0
        %v1115 = vadd.f32 0.0, %v1114
        %v1116 = vpop.f32.mrf.mxu0
        %1117 = vdwg.mxu0
        %v1118 = vadd.f32 %v946, %v1112
        %v1119 = vadd.f32 %v947, %v1115
        %1120 = vrot.lane.b32.xlu0 %v431, 96
        %v1121 = vpop.permute.xlu0 %1120
        %1122 = vrot.lane.b32.xlu0 %v431, 32
        %v1123 = vpop.permute.xlu0 %1122
        %v1125 = vsel %vm434, %v1121, 0
        %v1128 = vsel %vm434, %v1123, 0
        %1130 = vmatprep.subr.bf16.mxu0 0
        %1131 = vmatpush1.bf16.xpose.msra.mxu0 0
        %1132 = vmatprep.subr.bf16.mxu0 0
        %1133 = vmatpush1.bf16.xpose.msra.mxu0 0
        %1134 = vmatprep.subr.bf16.mxu0 0
        %1135 = vmatpush1.bf16.xpose.msra.mxu0 0
        %1136 = vmatprep.subr.bf16.mxu0 0
        %1137 = vmatpush1.bf16.xpose.msra.mxu0 0
        %1138 = vmatprep.subr.bf16.mxu0 0
        %1139 = vmatpush1.bf16.xpose.msra.mxu0 0
        %1140 = vmatprep.subr.bf16.mxu0 0
        %1141 = vmatpush1.bf16.xpose.msra.mxu0 0
        %1142 = vmatprep.subr.bf16.mxu0 0
        %1143 = vmatpush1.bf16.xpose.msra.mxu0 0
        %1144 = vmatprep.subr.bf16.mxu0 0
        %1145 = vmatpush1.bf16.xpose.msra.mxu0 %v1128
        %1146 = vmatprep.subr.bf16.mxu0 0
        %1147 = vmatpush2.bf16.xpose.msra.mxu0 0
        %1148 = vmatprep.subr.bf16.mxu0 0
        %1149 = vmatpush2.bf16.xpose.msra.mxu0 0
        %1150 = vmatprep.subr.bf16.mxu0 0
        %1151 = vmatpush2.bf16.xpose.msra.mxu0 0
        %1152 = vmatprep.subr.bf16.mxu0 0
        %1153 = vmatpush2.bf16.xpose.msra.mxu0 0
        %1154 = vmatprep.subr.bf16.mxu0 0
        %1155 = vmatpush2.bf16.xpose.msra.mxu0 0
        %1156 = vmatprep.subr.bf16.mxu0 0
        %1157 = vmatpush2.bf16.xpose.msra.mxu0 0
        %1158 = vmatprep.subr.bf16.mxu0 0
        %1159 = vmatpush2.bf16.xpose.msra.mxu0 0
        %1160 = vmatprep.subr.bf16.mxu0 0
        %1161 = vmatpush2.bf16.xpose.msra.mxu0 0
        %1162 = vmatprep.mubr.bf16.mxu0 0
        %1163 = vmatmul.mubr.bf16.gmra.mxu0 %v1125
        %v1164 = vpop.f32.mrf.mxu0
        %v1165 = vadd.f32 0.0, %v1164
        %v1166 = vpop.f32.mrf.mxu0
        %v1167 = vpop.f32.mrf.mxu0
        %v1168 = vadd.f32 0.0, %v1167
        %v1169 = vpop.f32.mrf.mxu0
        %1170 = vdwg.mxu0
        %v1171 = vsel %vm482, %v1165, -inf
        %1172 = vmax.xlane.f32.xlu0 %v1171
        %v1173 = vpop.xlane.xlu0 %1172
        %v1174 = vsel %vm482, %v1168, -inf
        %1175 = vmax.xlane.f32.xlu0 %v1174
        %v1176 = vpop.xlane.xlu0 %1175
        %v1177 = vsub.f32 %v1165, %v1173
        %v1178 = vsub.f32 %v1168, %v1176
        %v1179 = vmul.f32 %v1177, 1.442695
        %v1180 = vpow.pop %v1179
        %v1181 = vmul.f32 %v1178, 1.442695
        %v1182 = vpow.pop %v1181
        %v1183 = vsel %vm482, %v1180, 0.0
        %1184 = vadd.xlane.f32.xlu0 %v1183
        %v1185 = vpop.xlane.xlu0 %1184
        %v1186 = vsel %vm482, %v1182, 0.0
        %1187 = vadd.xlane.f32.xlu0 %v1186
        %v1188 = vpop.xlane.xlu0 %1187
        %v1189 = vrcp.pop %v1185
        %v1190 = vrcp.pop %v1188
        %v1191 = vpack.c.bf16 %v1182, %v1180
        %1192 = vrot.lane.b32.xlu0 %v508, 96
        %v1193 = vpop.permute.xlu0 %1192
        %v1196 = vsel %vm482, %v1191, 0
        %1198 = vmatprep.subr.bf16.mxu0 0
        %1199 = vmatpush1.bf16.msra.mxu0 0
        %1200 = vmatprep.subr.bf16.mxu0 0
        %1201 = vmatpush1.bf16.msra.mxu0 0
        %1202 = vmatprep.subr.bf16.mxu0 0
        %1203 = vmatpush1.bf16.msra.mxu0 0
        %1204 = vmatprep.subr.bf16.mxu0 0
        %1205 = vmatpush1.bf16.msra.mxu0 0
        %1206 = vmatprep.subr.bf16.mxu0 0
        %1207 = vmatpush1.bf16.msra.mxu0 0
        %1208 = vmatprep.subr.bf16.mxu0 0
        %1209 = vmatpush1.bf16.msra.mxu0 0
        %1210 = vmatprep.subr.bf16.mxu0 0
        %1211 = vmatpush1.bf16.msra.mxu0 0
        %1212 = vmatprep.subr.bf16.mxu0 0
        %1213 = vmatpush1.bf16.msra.mxu0 %v1193
        %1214 = vmatprep.subr.bf16.mxu0 0
        %1215 = vmatpush2.bf16.msra.mxu0 0
        %1216 = vmatprep.subr.bf16.mxu0 0
        %1217 = vmatpush2.bf16.msra.mxu0 0
        %1218 = vmatprep.subr.bf16.mxu0 0
        %1219 = vmatpush2.bf16.msra.mxu0 0
        %1220 = vmatprep.subr.bf16.mxu0 0
        %1221 = vmatpush2.bf16.msra.mxu0 0
        %1222 = vmatprep.subr.bf16.mxu0 0
        %1223 = vmatpush2.bf16.msra.mxu0 0
        %1224 = vmatprep.subr.bf16.mxu0 0
        %1225 = vmatpush2.bf16.msra.mxu0 0
        %1226 = vmatprep.subr.bf16.mxu0 0
        %1227 = vmatpush2.bf16.msra.mxu0 0
        %1228 = vmatprep.subr.bf16.mxu0 0
        %1229 = vmatpush2.bf16.msra.mxu0 0
        %1230 = vmatprep.mubr.bf16.mxu0 0
        %1231 = vmatmul.mubr.bf16.gmra.mxu0 %v1196
        %v1232 = vpop.f32.mrf.mxu0
        %v1233 = vadd.f32 0.0, %v1232
        %v1234 = vpop.f32.mrf.mxu0
        %v1235 = vpop.f32.mrf.mxu0
        %v1236 = vadd.f32 0.0, %v1235
        %v1237 = vpop.f32.mrf.mxu0
        %1238 = vdwg.mxu0
        %v1239 = vmul.f32 %v1233, %v1189
        %v1240 = vmul.f32 %v1236, %v1190
        %v1241 = vpack.c.bf16 %v1240, %v1239
        %v1242 = vld [vmem:[#allocation8 + $0x10] sm:$0xf]
        %v1244 = vsel %vm434, %v1241, 0
        %v1247 = vsel %vm684, %v1242, 0
        %1249 = vmatprep.subr.bf16.mxu0 0
        %1250 = vmatpush1.bf16.msra.mxu0 0
        %1251 = vmatprep.subr.bf16.mxu0 0
        %1252 = vmatpush1.bf16.msra.mxu0 0
        %1253 = vmatprep.subr.bf16.mxu0 0
        %1254 = vmatpush1.bf16.msra.mxu0 0
        %1255 = vmatprep.subr.bf16.mxu0 0
        %1256 = vmatpush1.bf16.msra.mxu0 0
        %1257 = vmatprep.subr.bf16.mxu0 0
        %1258 = vmatpush1.bf16.msra.mxu0 0
        %1259 = vmatprep.subr.bf16.mxu0 0
        %1260 = vmatpush1.bf16.msra.mxu0 0
        %1261 = vmatprep.subr.bf16.mxu0 0
        %1262 = vmatpush1.bf16.msra.mxu0 0
        %1263 = vmatprep.subr.bf16.mxu0 0
        %1264 = vmatpush1.bf16.msra.mxu0 %v1247
        %1265 = vmatprep.subr.bf16.mxu0 0
        %1266 = vmatpush2.bf16.msra.mxu0 0
        %1267 = vmatprep.subr.bf16.mxu0 0
        %1268 = vmatpush2.bf16.msra.mxu0 0
        %1269 = vmatprep.subr.bf16.mxu0 0
        %1270 = vmatpush2.bf16.msra.mxu0 0
        %1271 = vmatprep.subr.bf16.mxu0 0
        %1272 = vmatpush2.bf16.msra.mxu0 0
        %1273 = vmatprep.subr.bf16.mxu0 0
        %1274 = vmatpush2.bf16.msra.mxu0 0
        %1275 = vmatprep.subr.bf16.mxu0 0
        %1276 = vmatpush2.bf16.msra.mxu0 0
        %1277 = vmatprep.subr.bf16.mxu0 0
        %1278 = vmatpush2.bf16.msra.mxu0 0
        %1279 = vmatprep.subr.bf16.mxu0 0
        %1280 = vmatpush2.bf16.msra.mxu0 0
        %1281 = vmatprep.mubr.bf16.mxu0 0
        %1282 = vmatmul.mubr.bf16.gmra.mxu0 %v1244
        %v1283 = vpop.f32.mrf.mxu0
        %v1284 = vadd.f32 0.0, %v1283
        %v1285 = vpop.f32.mrf.mxu0
        %v1286 = vpop.f32.mrf.mxu0
        %v1287 = vadd.f32 0.0, %v1286
        %v1288 = vpop.f32.mrf.mxu0
        %1289 = vdwg.mxu0
        %v1290 = vadd.f32 %v1118, %v1284
        %v1291 = vadd.f32 %v1119, %v1287
        %1292 = vrot.lane.b32.xlu0 %v431, 88
        %v1293 = vpop.permute.xlu0 %1292
        %1294 = vrot.lane.b32.xlu0 %v431, 24
        %v1295 = vpop.permute.xlu0 %1294
        %v1297 = vsel %vm434, %v1293, 0
        %v1300 = vsel %vm434, %v1295, 0
        %1302 = vmatprep.subr.bf16.mxu0 0
        %1303 = vmatpush1.bf16.xpose.msra.mxu0 0
        %1304 = vmatprep.subr.bf16.mxu0 0
        %1305 = vmatpush1.bf16.xpose.msra.mxu0 0
        %1306 = vmatprep.subr.bf16.mxu0 0
        %1307 = vmatpush1.bf16.xpose.msra.mxu0 0
        %1308 = vmatprep.subr.bf16.mxu0 0
        %1309 = vmatpush1.bf16.xpose.msra.mxu0 0
        %1310 = vmatprep.subr.bf16.mxu0 0
        %1311 = vmatpush1.bf16.xpose.msra.mxu0 0
        %1312 = vmatprep.subr.bf16.mxu0 0
        %1313 = vmatpush1.bf16.xpose.msra.mxu0 0
        %1314 = vmatprep.subr.bf16.mxu0 0
        %1315 = vmatpush1.bf16.xpose.msra.mxu0 0
        %1316 = vmatprep.subr.bf16.mxu0 0
        %1317 = vmatpush1.bf16.xpose.msra.mxu0 %v1300
        %1318 = vmatprep.subr.bf16.mxu0 0
        %1319 = vmatpush2.bf16.xpose.msra.mxu0 0
        %1320 = vmatprep.subr.bf16.mxu0 0
        %1321 = vmatpush2.bf16.xpose.msra.mxu0 0
        %1322 = vmatprep.subr.bf16.mxu0 0
        %1323 = vmatpush2.bf16.xpose.msra.mxu0 0
        %1324 = vmatprep.subr.bf16.mxu0 0
        %1325 = vmatpush2.bf16.xpose.msra.mxu0 0
        %1326 = vmatprep.subr.bf16.mxu0 0
        %1327 = vmatpush2.bf16.xpose.msra.mxu0 0
        %1328 = vmatprep.subr.bf16.mxu0 0
        %1329 = vmatpush2.bf16.xpose.msra.mxu0 0
        %1330 = vmatprep.subr.bf16.mxu0 0
        %1331 = vmatpush2.bf16.xpose.msra.mxu0 0
        %1332 = vmatprep.subr.bf16.mxu0 0
        %1333 = vmatpush2.bf16.xpose.msra.mxu0 0
        %1334 = vmatprep.mubr.bf16.mxu0 0
        %1335 = vmatmul.mubr.bf16.gmra.mxu0 %v1297
        %v1336 = vpop.f32.mrf.mxu0
        %v1337 = vadd.f32 0.0, %v1336
        %v1338 = vpop.f32.mrf.mxu0
        %v1339 = vpop.f32.mrf.mxu0
        %v1340 = vadd.f32 0.0, %v1339
        %v1341 = vpop.f32.mrf.mxu0
        %1342 = vdwg.mxu0
        %v1343 = vsel %vm482, %v1337, -inf
        %1344 = vmax.xlane.f32.xlu0 %v1343
        %v1345 = vpop.xlane.xlu0 %1344
        %v1346 = vsel %vm482, %v1340, -inf
        %1347 = vmax.xlane.f32.xlu0 %v1346
        %v1348 = vpop.xlane.xlu0 %1347
        %v1349 = vsub.f32 %v1337, %v1345
        %v1350 = vsub.f32 %v1340, %v1348
        %v1351 = vmul.f32 %v1349, 1.442695
        %v1352 = vpow.pop %v1351
        %v1353 = vmul.f32 %v1350, 1.442695
        %v1354 = vpow.pop %v1353
        %v1355 = vsel %vm482, %v1352, 0.0
        %1356 = vadd.xlane.f32.xlu0 %v1355
        %v1357 = vpop.xlane.xlu0 %1356
        %v1358 = vsel %vm482, %v1354, 0.0
        %1359 = vadd.xlane.f32.xlu0 %v1358
        %v1360 = vpop.xlane.xlu0 %1359
        %v1361 = vrcp.pop %v1357
        %v1362 = vrcp.pop %v1360
        %v1363 = vpack.c.bf16 %v1354, %v1352
        %1364 = vrot.lane.b32.xlu0 %v508, 88
        %v1365 = vpop.permute.xlu0 %1364
        %v1368 = vsel %vm482, %v1363, 0
        %1370 = vmatprep.subr.bf16.mxu0 0
        %1371 = vmatpush1.bf16.msra.mxu0 0
        %1372 = vmatprep.subr.bf16.mxu0 0
        %1373 = vmatpush1.bf16.msra.mxu0 0
        %1374 = vmatprep.subr.bf16.mxu0 0
        %1375 = vmatpush1.bf16.msra.mxu0 0
        %1376 = vmatprep.subr.bf16.mxu0 0
        %1377 = vmatpush1.bf16.msra.mxu0 0
        %1378 = vmatprep.subr.bf16.mxu0 0
        %1379 = vmatpush1.bf16.msra.mxu0 0
        %1380 = vmatprep.subr.bf16.mxu0 0
        %1381 = vmatpush1.bf16.msra.mxu0 0
        %1382 = vmatprep.subr.bf16.mxu0 0
        %1383 = vmatpush1.bf16.msra.mxu0 0
        %1384 = vmatprep.subr.bf16.mxu0 0
        %1385 = vmatpush1.bf16.msra.mxu0 %v1365
        %1386 = vmatprep.subr.bf16.mxu0 0
        %1387 = vmatpush2.bf16.msra.mxu0 0
        %1388 = vmatprep.subr.bf16.mxu0 0
        %1389 = vmatpush2.bf16.msra.mxu0 0
        %1390 = vmatprep.subr.bf16.mxu0 0
        %1391 = vmatpush2.bf16.msra.mxu0 0
        %1392 = vmatprep.subr.bf16.mxu0 0
        %1393 = vmatpush2.bf16.msra.mxu0 0
        %1394 = vmatprep.subr.bf16.mxu0 0
        %1395 = vmatpush2.bf16.msra.mxu0 0
        %1396 = vmatprep.subr.bf16.mxu0 0
        %1397 = vmatpush2.bf16.msra.mxu0 0
        %1398 = vmatprep.subr.bf16.mxu0 0
        %1399 = vmatpush2.bf16.msra.mxu0 0
        %1400 = vmatprep.subr.bf16.mxu0 0
        %1401 = vmatpush2.bf16.msra.mxu0 0
        %1402 = vmatprep.mubr.bf16.mxu0 0
        %1403 = vmatmul.mubr.bf16.gmra.mxu0 %v1368
        %v1404 = vpop.f32.mrf.mxu0
        %v1405 = vadd.f32 0.0, %v1404
        %v1406 = vpop.f32.mrf.mxu0
        %v1407 = vpop.f32.mrf.mxu0
        %v1408 = vadd.f32 0.0, %v1407
        %v1409 = vpop.f32.mrf.mxu0
        %1410 = vdwg.mxu0
        %v1411 = vmul.f32 %v1405, %v1361
        %v1412 = vmul.f32 %v1408, %v1362
        %v1413 = vpack.c.bf16 %v1412, %v1411
        %v1414 = vld [vmem:[#allocation8 + $0x14] sm:$0xf]
        %v1416 = vsel %vm434, %v1413, 0
        %v1419 = vsel %vm684, %v1414, 0
        %1421 = vmatprep.subr.bf16.mxu0 0
        %1422 = vmatpush1.bf16.msra.mxu0 0
        %1423 = vmatprep.subr.bf16.mxu0 0
        %1424 = vmatpush1.bf16.msra.mxu0 0
        %1425 = vmatprep.subr.bf16.mxu0 0
        %1426 = vmatpush1.bf16.msra.mxu0 0
        %1427 = vmatprep.subr.bf16.mxu0 0
        %1428 = vmatpush1.bf16.msra.mxu0 0
        %1429 = vmatprep.subr.bf16.mxu0 0
        %1430 = vmatpush1.bf16.msra.mxu0 0
        %1431 = vmatprep.subr.bf16.mxu0 0
        %1432 = vmatpush1.bf16.msra.mxu0 0
        %1433 = vmatprep.subr.bf16.mxu0 0
        %1434 = vmatpush1.bf16.msra.mxu0 0
        %1435 = vmatprep.subr.bf16.mxu0 0
        %1436 = vmatpush1.bf16.msra.mxu0 %v1419
        %1437 = vmatprep.subr.bf16.mxu0 0
        %1438 = vmatpush2.bf16.msra.mxu0 0
        %1439 = vmatprep.subr.bf16.mxu0 0
        %1440 = vmatpush2.bf16.msra.mxu0 0
        %1441 = vmatprep.subr.bf16.mxu0 0
        %1442 = vmatpush2.bf16.msra.mxu0 0
        %1443 = vmatprep.subr.bf16.mxu0 0
        %1444 = vmatpush2.bf16.msra.mxu0 0
        %1445 = vmatprep.subr.bf16.mxu0 0
        %1446 = vmatpush2.bf16.msra.mxu0 0
        %1447 = vmatprep.subr.bf16.mxu0 0
        %1448 = vmatpush2.bf16.msra.mxu0 0
        %1449 = vmatprep.subr.bf16.mxu0 0
        %1450 = vmatpush2.bf16.msra.mxu0 0
        %1451 = vmatprep.subr.bf16.mxu0 0
        %1452 = vmatpush2.bf16.msra.mxu0 0
        %1453 = vmatprep.mubr.bf16.mxu0 0
        %1454 = vmatmul.mubr.bf16.gmra.mxu0 %v1416
        %v1455 = vpop.f32.mrf.mxu0
        %v1456 = vadd.f32 0.0, %v1455
        %v1457 = vpop.f32.mrf.mxu0
        %v1458 = vpop.f32.mrf.mxu0
        %v1459 = vadd.f32 0.0, %v1458
        %v1460 = vpop.f32.mrf.mxu0
        %1461 = vdwg.mxu0
        %v1462 = vadd.f32 %v1290, %v1456
        %v1463 = vadd.f32 %v1291, %v1459
        %1464 = vrot.lane.b32.xlu0 %v431, 80
        %v1465 = vpop.permute.xlu0 %1464
        %1466 = vrot.lane.b32.xlu0 %v431, 16
        %v1467 = vpop.permute.xlu0 %1466
        %v1469 = vsel %vm434, %v1465, 0
        %v1472 = vsel %vm434, %v1467, 0
        %1474 = vmatprep.subr.bf16.mxu0 0
        %1475 = vmatpush1.bf16.xpose.msra.mxu0 0
        %1476 = vmatprep.subr.bf16.mxu0 0
        %1477 = vmatpush1.bf16.xpose.msra.mxu0 0
        %1478 = vmatprep.subr.bf16.mxu0 0
        %1479 = vmatpush1.bf16.xpose.msra.mxu0 0
        %1480 = vmatprep.subr.bf16.mxu0 0
        %1481 = vmatpush1.bf16.xpose.msra.mxu0 0
        %1482 = vmatprep.subr.bf16.mxu0 0
        %1483 = vmatpush1.bf16.xpose.msra.mxu0 0
        %1484 = vmatprep.subr.bf16.mxu0 0
        %1485 = vmatpush1.bf16.xpose.msra.mxu0 0
        %1486 = vmatprep.subr.bf16.mxu0 0
        %1487 = vmatpush1.bf16.xpose.msra.mxu0 0
        %1488 = vmatprep.subr.bf16.mxu0 0
        %1489 = vmatpush1.bf16.xpose.msra.mxu0 %v1472
        %1490 = vmatprep.subr.bf16.mxu0 0
        %1491 = vmatpush2.bf16.xpose.msra.mxu0 0
        %1492 = vmatprep.subr.bf16.mxu0 0
        %1493 = vmatpush2.bf16.xpose.msra.mxu0 0
        %1494 = vmatprep.subr.bf16.mxu0 0
        %1495 = vmatpush2.bf16.xpose.msra.mxu0 0
        %1496 = vmatprep.subr.bf16.mxu0 0
        %1497 = vmatpush2.bf16.xpose.msra.mxu0 0
        %1498 = vmatprep.subr.bf16.mxu0 0
        %1499 = vmatpush2.bf16.xpose.msra.mxu0 0
        %1500 = vmatprep.subr.bf16.mxu0 0
        %1501 = vmatpush2.bf16.xpose.msra.mxu0 0
        %1502 = vmatprep.subr.bf16.mxu0 0
        %1503 = vmatpush2.bf16.xpose.msra.mxu0 0
        %1504 = vmatprep.subr.bf16.mxu0 0
        %1505 = vmatpush2.bf16.xpose.msra.mxu0 0
        %1506 = vmatprep.mubr.bf16.mxu0 0
        %1507 = vmatmul.mubr.bf16.gmra.mxu0 %v1469
        %v1508 = vpop.f32.mrf.mxu0
        %v1509 = vadd.f32 0.0, %v1508
        %v1510 = vpop.f32.mrf.mxu0
        %v1511 = vpop.f32.mrf.mxu0
        %v1512 = vadd.f32 0.0, %v1511
        %v1513 = vpop.f32.mrf.mxu0
        %1514 = vdwg.mxu0
        %v1515 = vsel %vm482, %v1509, -inf
        %1516 = vmax.xlane.f32.xlu0 %v1515
        %v1517 = vpop.xlane.xlu0 %1516
        %v1518 = vsel %vm482, %v1512, -inf
        %1519 = vmax.xlane.f32.xlu0 %v1518
        %v1520 = vpop.xlane.xlu0 %1519
        %v1521 = vsub.f32 %v1509, %v1517
        %v1522 = vsub.f32 %v1512, %v1520
        %v1523 = vmul.f32 %v1521, 1.442695
        %v1524 = vpow.pop %v1523
        %v1525 = vmul.f32 %v1522, 1.442695
        %v1526 = vpow.pop %v1525
        %v1527 = vsel %vm482, %v1524, 0.0
        %1528 = vadd.xlane.f32.xlu0 %v1527
        %v1529 = vpop.xlane.xlu0 %1528
        %v1530 = vsel %vm482, %v1526, 0.0
        %1531 = vadd.xlane.f32.xlu0 %v1530
        %v1532 = vpop.xlane.xlu0 %1531
        %v1533 = vrcp.pop %v1529
        %v1534 = vrcp.pop %v1532
        %v1535 = vpack.c.bf16 %v1526, %v1524
        %1536 = vrot.lane.b32.xlu0 %v508, 80
        %v1537 = vpop.permute.xlu0 %1536
        %v1540 = vsel %vm482, %v1535, 0
        %1542 = vmatprep.subr.bf16.mxu0 0
        %1543 = vmatpush1.bf16.msra.mxu0 0
        %1544 = vmatprep.subr.bf16.mxu0 0
        %1545 = vmatpush1.bf16.msra.mxu0 0
        %1546 = vmatprep.subr.bf16.mxu0 0
        %1547 = vmatpush1.bf16.msra.mxu0 0
        %1548 = vmatprep.subr.bf16.mxu0 0
        %1549 = vmatpush1.bf16.msra.mxu0 0
        %1550 = vmatprep.subr.bf16.mxu0 0
        %1551 = vmatpush1.bf16.msra.mxu0 0
        %1552 = vmatprep.subr.bf16.mxu0 0
        %1553 = vmatpush1.bf16.msra.mxu0 0
        %1554 = vmatprep.subr.bf16.mxu0 0
        %1555 = vmatpush1.bf16.msra.mxu0 0
        %1556 = vmatprep.subr.bf16.mxu0 0
        %1557 = vmatpush1.bf16.msra.mxu0 %v1537
        %1558 = vmatprep.subr.bf16.mxu0 0
        %1559 = vmatpush2.bf16.msra.mxu0 0
        %1560 = vmatprep.subr.bf16.mxu0 0
        %1561 = vmatpush2.bf16.msra.mxu0 0
        %1562 = vmatprep.subr.bf16.mxu0 0
        %1563 = vmatpush2.bf16.msra.mxu0 0
        %1564 = vmatprep.subr.bf16.mxu0 0
        %1565 = vmatpush2.bf16.msra.mxu0 0
        %1566 = vmatprep.subr.bf16.mxu0 0
        %1567 = vmatpush2.bf16.msra.mxu0 0
        %1568 = vmatprep.subr.bf16.mxu0 0
        %1569 = vmatpush2.bf16.msra.mxu0 0
        %1570 = vmatprep.subr.bf16.mxu0 0
        %1571 = vmatpush2.bf16.msra.mxu0 0
        %1572 = vmatprep.subr.bf16.mxu0 0
        %1573 = vmatpush2.bf16.msra.mxu0 0
        %1574 = vmatprep.mubr.bf16.mxu0 0
        %1575 = vmatmul.mubr.bf16.gmra.mxu0 %v1540
        %v1576 = vpop.f32.mrf.mxu0
        %v1577 = vadd.f32 0.0, %v1576
        %v1578 = vpop.f32.mrf.mxu0
        %v1579 = vpop.f32.mrf.mxu0
        %v1580 = vadd.f32 0.0, %v1579
        %v1581 = vpop.f32.mrf.mxu0
        %1582 = vdwg.mxu0
        %v1583 = vmul.f32 %v1577, %v1533
        %v1584 = vmul.f32 %v1580, %v1534
        %v1585 = vpack.c.bf16 %v1584, %v1583
        %v1586 = vld [vmem:[#allocation8 + $0x18] sm:$0xf]
        %v1588 = vsel %vm434, %v1585, 0
        %v1591 = vsel %vm684, %v1586, 0
        %1593 = vmatprep.subr.bf16.mxu0 0
        %1594 = vmatpush1.bf16.msra.mxu0 0
        %1595 = vmatprep.subr.bf16.mxu0 0
        %1596 = vmatpush1.bf16.msra.mxu0 0
        %1597 = vmatprep.subr.bf16.mxu0 0
        %1598 = vmatpush1.bf16.msra.mxu0 0
        %1599 = vmatprep.subr.bf16.mxu0 0
        %1600 = vmatpush1.bf16.msra.mxu0 0
        %1601 = vmatprep.subr.bf16.mxu0 0
        %1602 = vmatpush1.bf16.msra.mxu0 0
        %1603 = vmatprep.subr.bf16.mxu0 0
        %1604 = vmatpush1.bf16.msra.mxu0 0
        %1605 = vmatprep.subr.bf16.mxu0 0
        %1606 = vmatpush1.bf16.msra.mxu0 0
        %1607 = vmatprep.subr.bf16.mxu0 0
        %1608 = vmatpush1.bf16.msra.mxu0 %v1591
        %1609 = vmatprep.subr.bf16.mxu0 0
        %1610 = vmatpush2.bf16.msra.mxu0 0
        %1611 = vmatprep.subr.bf16.mxu0 0
        %1612 = vmatpush2.bf16.msra.mxu0 0
        %1613 = vmatprep.subr.bf16.mxu0 0
        %1614 = vmatpush2.bf16.msra.mxu0 0
        %1615 = vmatprep.subr.bf16.mxu0 0
        %1616 = vmatpush2.bf16.msra.mxu0 0
        %1617 = vmatprep.subr.bf16.mxu0 0
        %1618 = vmatpush2.bf16.msra.mxu0 0
        %1619 = vmatprep.subr.bf16.mxu0 0
        %1620 = vmatpush2.bf16.msra.mxu0 0
        %1621 = vmatprep.subr.bf16.mxu0 0
        %1622 = vmatpush2.bf16.msra.mxu0 0
        %1623 = vmatprep.subr.bf16.mxu0 0
        %1624 = vmatpush2.bf16.msra.mxu0 0
        %1625 = vmatprep.mubr.bf16.mxu0 0
        %1626 = vmatmul.mubr.bf16.gmra.mxu0 %v1588
        %v1627 = vpop.f32.mrf.mxu0
        %v1628 = vadd.f32 0.0, %v1627
        %v1629 = vpop.f32.mrf.mxu0
        %v1630 = vpop.f32.mrf.mxu0
        %v1631 = vadd.f32 0.0, %v1630
        %v1632 = vpop.f32.mrf.mxu0
        %1633 = vdwg.mxu0
        %v1634 = vadd.f32 %v1462, %v1628
        %v1635 = vadd.f32 %v1463, %v1631
        %1636 = vrot.lane.b32.xlu0 %v431, 72
        %v1637 = vpop.permute.xlu0 %1636
        %1638 = vrot.lane.b32.xlu0 %v431, 8
        %v1639 = vpop.permute.xlu0 %1638
        %v1641 = vsel %vm434, %v1637, 0
        %v1644 = vsel %vm434, %v1639, 0
        %1646 = vmatprep.subr.bf16.mxu0 0
        %1647 = vmatpush1.bf16.xpose.msra.mxu0 0
        %1648 = vmatprep.subr.bf16.mxu0 0
        %1649 = vmatpush1.bf16.xpose.msra.mxu0 0
        %1650 = vmatprep.subr.bf16.mxu0 0
        %1651 = vmatpush1.bf16.xpose.msra.mxu0 0
        %1652 = vmatprep.subr.bf16.mxu0 0
        %1653 = vmatpush1.bf16.xpose.msra.mxu0 0
        %1654 = vmatprep.subr.bf16.mxu0 0
        %1655 = vmatpush1.bf16.xpose.msra.mxu0 0
        %1656 = vmatprep.subr.bf16.mxu0 0
        %1657 = vmatpush1.bf16.xpose.msra.mxu0 0
        %1658 = vmatprep.subr.bf16.mxu0 0
        %1659 = vmatpush1.bf16.xpose.msra.mxu0 0
        %1660 = vmatprep.subr.bf16.mxu0 0
        %1661 = vmatpush1.bf16.xpose.msra.mxu0 %v1644
        %1662 = vmatprep.subr.bf16.mxu0 0
        %1663 = vmatpush2.bf16.xpose.msra.mxu0 0
        %1664 = vmatprep.subr.bf16.mxu0 0
        %1665 = vmatpush2.bf16.xpose.msra.mxu0 0
        %1666 = vmatprep.subr.bf16.mxu0 0
        %1667 = vmatpush2.bf16.xpose.msra.mxu0 0
        %1668 = vmatprep.subr.bf16.mxu0 0
        %1669 = vmatpush2.bf16.xpose.msra.mxu0 0
        %1670 = vmatprep.subr.bf16.mxu0 0
        %1671 = vmatpush2.bf16.xpose.msra.mxu0 0
        %1672 = vmatprep.subr.bf16.mxu0 0
        %1673 = vmatpush2.bf16.xpose.msra.mxu0 0
        %1674 = vmatprep.subr.bf16.mxu0 0
        %1675 = vmatpush2.bf16.xpose.msra.mxu0 0
        %1676 = vmatprep.subr.bf16.mxu0 0
        %1677 = vmatpush2.bf16.xpose.msra.mxu0 0
        %1678 = vmatprep.mubr.bf16.mxu0 0
        %1679 = vmatmul.mubr.bf16.gmra.mxu0 %v1641
        %v1680 = vpop.f32.mrf.mxu0
        %v1681 = vadd.f32 0.0, %v1680
        %v1682 = vpop.f32.mrf.mxu0
        %v1683 = vpop.f32.mrf.mxu0
        %v1684 = vadd.f32 0.0, %v1683
        %v1685 = vpop.f32.mrf.mxu0
        %1686 = vdwg.mxu0
        %v1687 = vsel %vm482, %v1681, -inf
        %1688 = vmax.xlane.f32.xlu0 %v1687
        %v1689 = vpop.xlane.xlu0 %1688
        %v1690 = vsel %vm482, %v1684, -inf
        %1691 = vmax.xlane.f32.xlu0 %v1690
        %v1692 = vpop.xlane.xlu0 %1691
        %v1693 = vsub.f32 %v1681, %v1689
        %v1694 = vsub.f32 %v1684, %v1692
        %v1695 = vmul.f32 %v1693, 1.442695
        %v1696 = vpow.pop %v1695
        %v1697 = vmul.f32 %v1694, 1.442695
        %v1698 = vpow.pop %v1697
        %v1699 = vsel %vm482, %v1696, 0.0
        %1700 = vadd.xlane.f32.xlu0 %v1699
        %v1701 = vpop.xlane.xlu0 %1700
        %v1702 = vsel %vm482, %v1698, 0.0
        %1703 = vadd.xlane.f32.xlu0 %v1702
        %v1704 = vpop.xlane.xlu0 %1703
        %v1705 = vrcp.pop %v1701
        %v1706 = vrcp.pop %v1704
        %v1707 = vpack.c.bf16 %v1698, %v1696
        %1708 = vrot.lane.b32.xlu0 %v508, 72
        %v1709 = vpop.permute.xlu0 %1708
        %v1712 = vsel %vm482, %v1707, 0
        %1714 = vmatprep.subr.bf16.mxu0 0
        %1715 = vmatpush1.bf16.msra.mxu0 0
        %1716 = vmatprep.subr.bf16.mxu0 0
        %1717 = vmatpush1.bf16.msra.mxu0 0
        %1718 = vmatprep.subr.bf16.mxu0 0
        %1719 = vmatpush1.bf16.msra.mxu0 0
        %1720 = vmatprep.subr.bf16.mxu0 0
        %1721 = vmatpush1.bf16.msra.mxu0 0
        %1722 = vmatprep.subr.bf16.mxu0 0
        %1723 = vmatpush1.bf16.msra.mxu0 0
        %1724 = vmatprep.subr.bf16.mxu0 0
        %1725 = vmatpush1.bf16.msra.mxu0 0
        %1726 = vmatprep.subr.bf16.mxu0 0
        %1727 = vmatpush1.bf16.msra.mxu0 0
        %1728 = vmatprep.subr.bf16.mxu0 0
        %1729 = vmatpush1.bf16.msra.mxu0 %v1709
        %1730 = vmatprep.subr.bf16.mxu0 0
        %1731 = vmatpush2.bf16.msra.mxu0 0
        %1732 = vmatprep.subr.bf16.mxu0 0
        %1733 = vmatpush2.bf16.msra.mxu0 0
        %1734 = vmatprep.subr.bf16.mxu0 0
        %1735 = vmatpush2.bf16.msra.mxu0 0
        %1736 = vmatprep.subr.bf16.mxu0 0
        %1737 = vmatpush2.bf16.msra.mxu0 0
        %1738 = vmatprep.subr.bf16.mxu0 0
        %1739 = vmatpush2.bf16.msra.mxu0 0
        %1740 = vmatprep.subr.bf16.mxu0 0
        %1741 = vmatpush2.bf16.msra.mxu0 0
        %1742 = vmatprep.subr.bf16.mxu0 0
        %1743 = vmatpush2.bf16.msra.mxu0 0
        %1744 = vmatprep.subr.bf16.mxu0 0
        %1745 = vmatpush2.bf16.msra.mxu0 0
        %1746 = vmatprep.mubr.bf16.mxu0 0
        %1747 = vmatmul.mubr.bf16.gmra.mxu0 %v1712
        %v1748 = vpop.f32.mrf.mxu0
        %v1749 = vadd.f32 0.0, %v1748
        %v1750 = vpop.f32.mrf.mxu0
        %v1751 = vpop.f32.mrf.mxu0
        %v1752 = vadd.f32 0.0, %v1751
        %v1753 = vpop.f32.mrf.mxu0
        %1754 = vdwg.mxu0
        %v1755 = vmul.f32 %v1749, %v1705
        %v1756 = vmul.f32 %v1752, %v1706
        %v1757 = vpack.c.bf16 %v1756, %v1755
        %v1758 = vld [vmem:[#allocation8 + $0x1c] sm:$0xf]
        %v1760 = vsel %vm434, %v1757, 0
        %v1763 = vsel %vm684, %v1758, 0
        %1765 = vmatprep.subr.bf16.mxu0 0
        %1766 = vmatpush1.bf16.msra.mxu0 0
        %1767 = vmatprep.subr.bf16.mxu0 0
        %1768 = vmatpush1.bf16.msra.mxu0 0
        %1769 = vmatprep.subr.bf16.mxu0 0
        %1770 = vmatpush1.bf16.msra.mxu0 0
        %1771 = vmatprep.subr.bf16.mxu0 0
        %1772 = vmatpush1.bf16.msra.mxu0 0
        %1773 = vmatprep.subr.bf16.mxu0 0
        %1774 = vmatpush1.bf16.msra.mxu0 0
        %1775 = vmatprep.subr.bf16.mxu0 0
        %1776 = vmatpush1.bf16.msra.mxu0 0
        %1777 = vmatprep.subr.bf16.mxu0 0
        %1778 = vmatpush1.bf16.msra.mxu0 0
        %1779 = vmatprep.subr.bf16.mxu0 0
        %1780 = vmatpush1.bf16.msra.mxu0 %v1763
        %1781 = vmatprep.subr.bf16.mxu0 0
        %1782 = vmatpush2.bf16.msra.mxu0 0
        %1783 = vmatprep.subr.bf16.mxu0 0
        %1784 = vmatpush2.bf16.msra.mxu0 0
        %1785 = vmatprep.subr.bf16.mxu0 0
        %1786 = vmatpush2.bf16.msra.mxu0 0
        %1787 = vmatprep.subr.bf16.mxu0 0
        %1788 = vmatpush2.bf16.msra.mxu0 0
        %1789 = vmatprep.subr.bf16.mxu0 0
        %1790 = vmatpush2.bf16.msra.mxu0 0
        %1791 = vmatprep.subr.bf16.mxu0 0
        %1792 = vmatpush2.bf16.msra.mxu0 0
        %1793 = vmatprep.subr.bf16.mxu0 0
        %1794 = vmatpush2.bf16.msra.mxu0 0
        %1795 = vmatprep.subr.bf16.mxu0 0
        %1796 = vmatpush2.bf16.msra.mxu0 0
        %1797 = vmatprep.mubr.bf16.mxu0 0
        %1798 = vmatmul.mubr.bf16.gmra.mxu0 %v1760
        %v1799 = vpop.f32.mrf.mxu0
        %v1800 = vadd.f32 0.0, %v1799
        %v1801 = vpop.f32.mrf.mxu0
        %v1802 = vpop.f32.mrf.mxu0
        %v1803 = vadd.f32 0.0, %v1802
        %v1804 = vpop.f32.mrf.mxu0
        %1805 = vdwg.mxu0
        %v1806 = vadd.f32 %v1634, %v1800
        %v1807 = vadd.f32 %v1635, %v1803
        %v1808 = vld [vmem:[%s4] sm:$0x1]
        %v1810 = vlaneseq
        %v1811 = vshrl.u32 %v1810, 7
        %v1812 = vsub.s32 0, %v1811
        %v1813 = vrot.slane %v1808, %v1812
        %v1815 = vadd.f32 %v1806, %v1813
        %v1816 = vadd.f32 %v1807, %v1813
        %vm1817 = vcmask 523264
        %1818 = vst.msk [vmem:[%s285] sm:$0xff] %vm1817, %v1815
        %1819 = vst.msk [vmem:[%s285 + $0x8] sm:$0xff] %vm1817, %v1816
        %s1820 = sand.u32 %s155, 1
        %s1821 = scalar_lea.sflag [#allocation5], %s1820
        %s1822 = sand.u32 %s155, 1
        %s1823 = smul.addr %s1822, 16
        %s1824 = scalar_lea.vmem [#allocation9], %s1823
        // Predicated region
        $region57: #{tpu_custom_call.1} parent=39 // pred_check
          %p1825 = pneg %p165
        $region58: #{tpu_custom_call.1} parent=39 // pred_check_branch
          %1827 = sbr.rel (%p1825) target = $region60
        $region59: #{tpu_custom_call.1} parent=39 // pred_region
          %s1828 = smul.u32 2, %s28
          %s1830 = ssub.s32 256, 256
          %1831 = vsyncadd %s1821, %s1830
          %s1832 = smul.addr %s27, 2
          %s1833 = sadd.s32 %s1828, %s1832
          %s1834 = smul.addr %s1833, 128
          %s1835 = scalar_lea.hbm %s5, %s1834
          %s1836 = sshll.u32 %s1824, 4
          %s1837 = int_to_ptr.vmem [resolvable:$true] %s1836
          %1842 = dma.vmem_to_hbm [thread:$0]  %s1837, 256, %s1835, %s1821, 128, 128, 8
        $region60: #{tpu_custom_call.1} parent=39 // pred_fallthru
          _
      $region40: #{tpu_custom_call.1} parent=5 // pred_fallthru
        _
      %p1843 = scmp.le.s32.totalorder 2, %s18
      // Predicated region
      $region61: #{tpu_custom_call.1} parent=5 // pred_check
        %p1844 = pneg %p1843
      $region62: #{tpu_custom_call.1} parent=5 // pred_check_branch
        %1846 = sbr.rel (%p1844) target = $region64
      $region63: #{tpu_custom_call.1} parent=5 // pred_region
        %s1847 = ssub.s32 %s18, 2
        // Predicated region
        $region65: #{tpu_custom_call.1} parent=63 // pred_check
          %p1848 = pneg %p171
        $region66: #{tpu_custom_call.1} parent=63 // pred_check_branch
          %1850 = sbr.rel (%p1848) target = $region68
        $region67: #{tpu_custom_call.1} parent=63 // pred_region
          %s1851 = sand.u32 %s156, 1
          %s1852 = scalar_lea.sflag [#allocation5], %s1851
          %s1853 = sand.u32 %s156, 1
          %s1854 = smul.addr %s1853, 16
          %s1855 = scalar_lea.vmem [#allocation9], %s1854
          %1856 = dma.done %s1852, 256
        $region68: #{tpu_custom_call.1} parent=63 // pred_fallthru
          _
      $region64: #{tpu_custom_call.1} parent=5 // pred_fallthru
        _
    $region6: #{tpu_custom_call.1} parent=1 // loop_footer
      %s22 = sadd.s32 1, %s18
    $region7: #{tpu_custom_call.1} parent=1 // loop_footer_branch
      %17 = sbr.rel target = $region3
    $region8: #{tpu_custom_call.1} parent=1 // loop_exit
      _
    %1857 = vsyncpa [#allocation4], 1
    %s1858 = scalar_lea.sflag [#allocation4], 1
    %1859 = vsyncpa %s1858, 1
    %1860 = vsyncpa [#allocation7], 1
    %1861 = vsyncpa [#allocation5], 1
    %s1862 = scalar_lea.sflag [#allocation5], 1
    %1863 = vsyncpa %s1862, 1

</llo_original>
